<compile_context>
chip_gen: v7x
topology: tpu7x:2x2x1
jax: 0.10.0
libtpu: 0.0.40
codegen_flags: <defaults>
</compile_context>

<pallas_src>
import jax
import jax.numpy as jnp
from jax.experimental import pallas as pl
from jax.experimental.pallas import tpu as pltpu


# ---------------------------------------------------------------------------
# Fused kernel: 2 stacked LSTM layers + final Linear, single invocation.
#   x:      (seq, bt, in_dim)        wih1_t: (in_dim, 4H)   whh1_t: (H, 4H)
#   b1/b2:  (1, 4H)  (b_ih + b_hh)   w2_cat: (2H, 4H) = [wih2_t; whh2_t]
#   wl_t:   (H, 1)   bl: (1, 1)      out:    (bt, 1)
# Gate order follows PyTorch: i, f, g, o.
# ---------------------------------------------------------------------------
def _fused_lstm_kernel(x_ref, wih1_ref, whh1_ref, b1_ref,
                       w2_ref, b2_ref, wl_ref, bl_ref,
                       out_ref, xg1_scr):
    seq, bt, in_dim = x_ref.shape
    H = whh1_ref.shape[0]

    # ---- preamble: layer-1 input projection for ALL timesteps, one MXU pass
    x2d = x_ref[...].reshape(seq * bt, in_dim)
    xg1_scr[...] = (
        jnp.dot(x2d, wih1_ref[...], preferred_element_type=jnp.float32)
        + b1_ref[...]
    ).reshape(seq, bt, 4 * H)

    # Hoist weight / bias loads out of the recurrence.
    whh1 = whh1_ref[...]
    w2 = w2_ref[...]
    b2 = b2_ref[...]

    def act(g, c_prev):
        # One full-width sigmoid over (bt, 4H); tanh only on the g-gate slice.
        sig = jax.nn.sigmoid(g)
        i_g = sig[:, 0 * H:1 * H]
        f_g = sig[:, 1 * H:2 * H]
        o_g = sig[:, 3 * H:4 * H]
        g_g = jnp.tanh(g[:, 2 * H:3 * H])
        c_new = f_g * c_prev + i_g * g_g
        h_new = o_g * jnp.tanh(c_new)
        return h_new, c_new

    def step(t, carry):
        h1, c1, h2, c2 = carry
        # ---- layer 1: input projection precomputed; only recurrent matmul here
        g1 = xg1_scr[t] + jnp.dot(h1, whh1, preferred_element_type=jnp.float32)
        h1, c1 = act(g1, c1)
        # ---- layer 2: single fused matmul on [h1 | h2_prev]
        g2 = jnp.dot(jnp.concatenate([h1, h2], axis=1), w2,
                     preferred_element_type=jnp.float32) + b2
        h2, c2 = act(g2, c2)
        return (h1, c1, h2, c2)

    z = jnp.zeros((bt, H), jnp.float32)
    _, _, h2, _ = jax.lax.fori_loop(
        0, seq, step, (z, z, z, z),
        unroll=(seq if seq <= 32 else 4))

    # ---- epilogue: final Linear on the last hidden state of layer 2
    out_ref[...] = (
        jnp.dot(h2, wl_ref[...], preferred_element_type=jnp.float32)
        + bl_ref[...]
    )


# ---------------------------------------------------------------------------
# Parameter init (PyTorch layout) and one-time packing for the kernel.
# ---------------------------------------------------------------------------
def init_params(key, input_dim, hidden_dim):
    """PyTorch-style uniform(-1/sqrt(H), 1/sqrt(H)) init, deterministic."""
    H = hidden_dim
    bound = 1.0 / jnp.sqrt(jnp.float32(H))

    def u(k, shape):
        return jax.random.uniform(k, shape, jnp.float32, -bound, bound)

    ks = jax.random.split(key, 11)
    return {
        # lstm_1 (input_dim -> H)
        "wih1": u(ks[0], (4 * H, input_dim)),
        "whh1": u(ks[1], (4 * H, H)),
        "bih1": u(ks[2], (4 * H,)),
        "bhh1": u(ks[3], (4 * H,)),
        # lstm_2 (H -> H)
        "wih2": u(ks[4], (4 * H, H)),
        "whh2": u(ks[5], (4 * H, H)),
        "bih2": u(ks[6], (4 * H,)),
        "bhh2": u(ks[7], (4 * H,)),
        # linear (H -> 1)
        "wl": u(ks[8], (1, H)),
        "bl": u(ks[9], (1,)),
    }


def pack_params(p):
    """Pre-transpose / pre-sum biases / pre-concat layer-2 weights ONCE."""
    H = p["whh1"].shape[1]
    f32 = jnp.float32
    return {
        "wih1_t": p["wih1"].T.astype(f32),                               # (in, 4H)
        "whh1_t": p["whh1"].T.astype(f32),                               # (H, 4H)
        "b1": (p["bih1"] + p["bhh1"]).reshape(1, 4 * H).astype(f32),     # (1, 4H)
        # layer-2: [wih2_t ; whh2_t] so one matmul does both projections.
        "w2_cat": jnp.concatenate(
            [p["wih2"].T, p["whh2"].T], axis=0).astype(f32),             # (2H, 4H)
        "b2": (p["bih2"] + p["bhh2"]).reshape(1, 4 * H).astype(f32),     # (1, 4H)
        "wl_t": p["wl"].T.astype(f32),                                   # (H, 1)
        "bl": p["bl"].reshape(1, 1).astype(f32),                         # (1, 1)
    }


# ---------------------------------------------------------------------------
# Forward: one fused pallas_call, batch-parallel grid.
# ---------------------------------------------------------------------------
def _round_up(n, m):
    return ((n + m - 1) // m) * m


@jax.jit
def lstm_model_forward(x, packed):
    seq, batch, in_dim = x.shape
    H = packed["whh1_t"].shape[0]

    # Pad batch to sublane granularity; split into batch tiles for the grid
    # (enables 2-TC sharding on v7x for large batches; grid=(1,) here).
    bp = max(8, _round_up(batch, 8))
    bt = bp if bp <= 64 else 64
    bp = _round_up(bp, bt)
    grid = (bp // bt,)

    xp = jnp.zeros((seq, bp, in_dim), jnp.float32).at[:, :batch, :].set(
        x.astype(jnp.float32))

    # Explicit VMEM budget (covers v5e's 16 MiB scoped default; capped for v7x).
    lp = lambda n: _round_up(n, 128)
    est = 4 * (
        seq * bt * lp(4 * H)                               # xg1 scratch
        + 2 * seq * _round_up(bt, 8) * lp(in_dim)          # x tile (double-buffered)
        + 2 * (_round_up(in_dim, 8) + _round_up(H, 8)
               + _round_up(2 * H, 8) + 16) * lp(4 * H)     # weights + biases
        + 2 * _round_up(H, 8) * lp(1)                      # wl
        + 2 * _round_up(bt, 8) * lp(1)                     # out tile
    )
    vmem_limit = int(min(max(2 * est + (4 << 20), 16 << 20), 96 << 20))

    out_pad = pl.pallas_call(
        _fused_lstm_kernel,
        out_shape=jax.ShapeDtypeStruct((bp, 1), jnp.float32),
        grid=grid,
        in_specs=[
            pl.BlockSpec((seq, bt, in_dim), lambda b: (0, b, 0)),   # x
            pl.BlockSpec((in_dim, 4 * H), lambda b: (0, 0)),        # wih1_t
            pl.BlockSpec((H, 4 * H), lambda b: (0, 0)),             # whh1_t
            pl.BlockSpec((1, 4 * H), lambda b: (0, 0)),             # b1
            pl.BlockSpec((2 * H, 4 * H), lambda b: (0, 0)),         # w2_cat
            pl.BlockSpec((1, 4 * H), lambda b: (0, 0)),             # b2
            pl.BlockSpec((H, 1), lambda b: (0, 0)),                 # wl_t
            pl.BlockSpec((1, 1), lambda b: (0, 0)),                 # bl
        ],
        out_specs=pl.BlockSpec((bt, 1), lambda b: (b, 0)),
        scratch_shapes=[
            pltpu.VMEM((seq, bt, 4 * H), jnp.float32),  # hoisted layer-1 input gates
        ],
        compiler_params=pltpu.CompilerParams(
            dimension_semantics=("parallel",),
            vmem_limit_bytes=vmem_limit),
    )(xp, packed["wih1_t"], packed["whh1_t"], packed["b1"],
      packed["w2_cat"], packed["b2"], packed["wl_t"], packed["bl"])
    return out_pad[:batch]                                # (batch, 1)


# ---------------------------------------------------------------------------
# Pure-JAX reference (lax.scan) for correctness check
# ---------------------------------------------------------------------------
def _ref_lstm_layer(x, wih, whh, b_ih, b_hh):
    H = whh.shape[1]
    wih_t, whh_t = wih.T, whh.T
    b = (b_ih + b_hh)[None, :]

    def step(carry, x_t):
        h, c = carry
        gates = x_t @ wih_t + h @ whh_t + b
        i = jax.nn.sigmoid(gates[:, 0 * H:1 * H])
        f = jax.nn.sigmoid(gates[:, 1 * H:2 * H])
        g = jnp.tanh(gates[:, 2 * H:3 * H])
        o = jax.nn.sigmoid(gates[:, 3 * H:4 * H])
        c = f * c + i * g
        h = o * jnp.tanh(c)
        return (h, c), h

    batch = x.shape[1]
    init = (jnp.zeros((batch, H), jnp.float32), jnp.zeros((batch, H), jnp.float32))
    _, hs = jax.lax.scan(step, init, x)
    return hs


def _ref_forward(x, p):
    h1 = _ref_lstm_layer(x, p["wih1"], p["whh1"], p["bih1"], p["bhh1"])
    h2 = _ref_lstm_layer(h1, p["wih2"], p["whh2"], p["bih2"], p["bhh2"])
    return h2[-1] @ p["wl"].T + p["bl"][None, :]


if __name__ == "__main__":
    seq_len, batch, input_dim, hidden_dim = 8, 2, 4, 32

    key = jax.random.PRNGKey(0)
    kx, kp = jax.random.split(key)
    x = jax.random.normal(kx, (seq_len, batch, input_dim), jnp.float32)
    params = init_params(kp, input_dim, hidden_dim)
    packed = pack_params(params)

    out = lstm_model_forward(x, packed)
    out = jax.block_until_ready(out)

    ref = _ref_forward(x, params)
    assert out.shape == (batch, 1), out.shape
    assert jnp.allclose(out, ref, atol=1e-4, rtol=1e-4), (out, ref)
    print("KERNEL_OK")
</pallas_src>

<mosaic_0001>
module attributes {stable_mosaic.version = 11 : i64} {
  func.func @_fused_lstm_kernel(%arg0: i32, %arg1: memref<8x8x4xf32, #tpu.memory_space<vmem>>, %arg2: memref<4x128xf32, #tpu.memory_space<vmem>>, %arg3: memref<32x128xf32, #tpu.memory_space<vmem>>, %arg4: memref<1x128xf32, #tpu.memory_space<vmem>>, %arg5: memref<64x128xf32, #tpu.memory_space<vmem>>, %arg6: memref<1x128xf32, #tpu.memory_space<vmem>>, %arg7: memref<32x1xf32, #tpu.memory_space<vmem>>, %arg8: memref<1x1xf32, #tpu.memory_space<vmem>>, %arg9: memref<8x1xf32, #tpu.memory_space<vmem>>, %arg10: memref<8x8x128xf32, #tpu.memory_space<vmem>>) attributes {dimension_semantics = [#tpu.dimension_semantics<parallel>], iteration_bounds = array<i64: 1>, scalar_prefetch = 0 : i64, scratch_operands = 1 : i64, tpu.core_type = #tpu.core_type<tc>, window_params = [{transform_indices = @transform_0, window_bounds = array<i64: 8, 8, 4>}, {pipeline_mode = #tpu.pipeline_mode<synchronous>, transform_indices = @transform_1, window_bounds = array<i64: 4, 128>}, {pipeline_mode = #tpu.pipeline_mode<synchronous>, transform_indices = @transform_2, window_bounds = array<i64: 32, 128>}, {pipeline_mode = #tpu.pipeline_mode<synchronous>, transform_indices = @transform_3, window_bounds = array<i64: 1, 128>}, {pipeline_mode = #tpu.pipeline_mode<synchronous>, transform_indices = @transform_4, window_bounds = array<i64: 64, 128>}, {pipeline_mode = #tpu.pipeline_mode<synchronous>, transform_indices = @transform_5, window_bounds = array<i64: 1, 128>}, {pipeline_mode = #tpu.pipeline_mode<synchronous>, transform_indices = @transform_6, window_bounds = array<i64: 32, 1>}, {pipeline_mode = #tpu.pipeline_mode<synchronous>, transform_indices = @transform_7, window_bounds = array<i64: 1, 1>}, {transform_indices = @transform_8, window_bounds = array<i64: 8, 1>}]} {
    %c0 = arith.constant 0 : index
    %c0_0 = arith.constant 0 : index
    %c0_1 = arith.constant 0 : index
    %0 = vector.load %arg1[%c0, %c0_0, %c0_1] : memref<8x8x4xf32, #tpu.memory_space<vmem>>, vector<8x8x4xf32>
    %1 = vector.shape_cast %0 : vector<8x8x4xf32> to vector<64x4xf32>
    %c0_2 = arith.constant 0 : index
    %c0_3 = arith.constant 0 : index
    %2 = vector.load %arg2[%c0_2, %c0_3] : memref<4x128xf32, #tpu.memory_space<vmem>>, vector<4x128xf32>
    %cst = arith.constant dense<0.000000e+00> : vector<64x128xf32>
    %3 = tpu.matmul %1, %2, %cst {dimension_numbers = #tpu.dot_dimension_numbers<[1], [0], [0], [1], [0, 0, 1, 1], [], []>} : vector<64x4xf32>, vector<4x128xf32>, vector<64x128xf32> -> vector<64x128xf32>
    %c0_4 = arith.constant 0 : index
    %c0_5 = arith.constant 0 : index
    %4 = vector.load %arg4[%c0_4, %c0_5] : memref<1x128xf32, #tpu.memory_space<vmem>>, vector<1x128xf32>
    %5 = vector.broadcast %4 : vector<1x128xf32> to vector<64x128xf32>
    %6 = arith.addf %3, %5 : vector<64x128xf32>
    %7 = vector.shape_cast %6 : vector<64x128xf32> to vector<8x8x128xf32>
    %c0_6 = arith.constant 0 : index
    %c0_7 = arith.constant 0 : index
    %c0_8 = arith.constant 0 : index
    %8 = vector.load %arg10[%c0_6, %c0_7, %c0_8] : memref<8x8x128xf32, #tpu.memory_space<vmem>>, vector<8x8x128xf32>
    tpu.vector_store %arg10[%c0_6, %c0_7, %c0_8], %7 {strides = array<i32>} : memref<8x8x128xf32, #tpu.memory_space<vmem>>, vector<8x8x128xf32>,
    %c0_9 = arith.constant 0 : index
    %c0_10 = arith.constant 0 : index
    %9 = vector.load %arg3[%c0_9, %c0_10] : memref<32x128xf32, #tpu.memory_space<vmem>>, vector<32x128xf32>
    %c0_11 = arith.constant 0 : index
    %c0_12 = arith.constant 0 : index
    %10 = vector.load %arg5[%c0_11, %c0_12] : memref<64x128xf32, #tpu.memory_space<vmem>>, vector<64x128xf32>
    %c0_13 = arith.constant 0 : index
    %c0_14 = arith.constant 0 : index
    %11 = vector.load %arg6[%c0_13, %c0_14] : memref<1x128xf32, #tpu.memory_space<vmem>>, vector<1x128xf32>
    %cst_15 = arith.constant 0.000000e+00 : f32
    %12 = vector.broadcast %cst_15 : f32 to vector<8x32xf32>
    %c0_i32 = arith.constant 0 : i32
    %13 = arith.index_cast %c0_i32 : i32 to index
    %c0_16 = arith.constant 0 : index
    %c0_17 = arith.constant 0 : index
    %14 = vector.load %arg10[%13, %c0_16, %c0_17] : memref<8x8x128xf32, #tpu.memory_space<vmem>>, vector<1x8x128xf32>
    %15 = vector.shape_cast %14 : vector<1x8x128xf32> to vector<8x128xf32>
    %cst_18 = arith.constant dense<0.000000e+00> : vector<8x128xf32>
    %16 = tpu.matmul %12, %9, %cst_18 {dimension_numbers = #tpu.dot_dimension_numbers<[1], [0], [0], [1], [0, 0, 1, 1], [], []>} : vector<8x32xf32>, vector<32x128xf32>, vector<8x128xf32> -> vector<8x128xf32>
    %17 = arith.addf %15, %16 : vector<8x128xf32>
    %18 = arith.negf %17 : vector<8x128xf32>
    %19 = math.exp %18 : vector<8x128xf32>
    %cst_19 = arith.constant 1.000000e+00 : f32
    %20 = vector.broadcast %cst_19 : f32 to vector<8x128xf32>
    %21 = arith.addf %20, %19 : vector<8x128xf32>
    %22 = arith.divf %20, %21 : vector<8x128xf32>
    %23 = vector.extract_strided_slice %22 {offsets = [0, 0], sizes = [8, 32], strides = [1, 1]} : vector<8x128xf32> to vector<8x32xf32>
    %24 = vector.extract_strided_slice %22 {offsets = [0, 32], sizes = [8, 32], strides = [1, 1]} : vector<8x128xf32> to vector<8x32xf32>
    %25 = vector.extract_strided_slice %22 {offsets = [0, 96], sizes = [8, 32], strides = [1, 1]} : vector<8x128xf32> to vector<8x32xf32>
    %26 = vector.extract_strided_slice %17 {offsets = [0, 64], sizes = [8, 32], strides = [1, 1]} : vector<8x128xf32> to vector<8x32xf32>
    %27 = math.tanh %26 : vector<8x32xf32>
    %28 = arith.mulf %24, %12 : vector<8x32xf32>
    %29 = arith.mulf %23, %27 : vector<8x32xf32>
    %30 = arith.addf %28, %29 : vector<8x32xf32>
    %31 = math.tanh %30 : vector<8x32xf32>
    %32 = arith.mulf %25, %31 : vector<8x32xf32>
    %33 = tpu.concatenate %32, %12 in 1 : vector<8x32xf32>, vector<8x32xf32> -> vector<8x64xf32>
    %cst_20 = arith.constant dense<0.000000e+00> : vector<8x128xf32>
    %34 = tpu.matmul %33, %10, %cst_20 {dimension_numbers = #tpu.dot_dimension_numbers<[1], [0], [0], [1], [0, 0, 1, 1], [], []>} : vector<8x64xf32>, vector<64x128xf32>, vector<8x128xf32> -> vector<8x128xf32>
    %35 = vector.broadcast %11 : vector<1x128xf32> to vector<8x128xf32>
    %36 = arith.addf %34, %35 : vector<8x128xf32>
    %37 = arith.negf %36 : vector<8x128xf32>
    %38 = math.exp %37 : vector<8x128xf32>
    %cst_21 = arith.constant 1.000000e+00 : f32
    %39 = vector.broadcast %cst_21 : f32 to vector<8x128xf32>
    %40 = arith.addf %39, %38 : vector<8x128xf32>
    %41 = arith.divf %39, %40 : vector<8x128xf32>
    %42 = vector.extract_strided_slice %41 {offsets = [0, 0], sizes = [8, 32], strides = [1, 1]} : vector<8x128xf32> to vector<8x32xf32>
    %43 = vector.extract_strided_slice %41 {offsets = [0, 32], sizes = [8, 32], strides = [1, 1]} : vector<8x128xf32> to vector<8x32xf32>
    %44 = vector.extract_strided_slice %41 {offsets = [0, 96], sizes = [8, 32], strides = [1, 1]} : vector<8x128xf32> to vector<8x32xf32>
    %45 = vector.extract_strided_slice %36 {offsets = [0, 64], sizes = [8, 32], strides = [1, 1]} : vector<8x128xf32> to vector<8x32xf32>
    %46 = math.tanh %45 : vector<8x32xf32>
    %47 = arith.mulf %43, %12 : vector<8x32xf32>
    %48 = arith.mulf %42, %46 : vector<8x32xf32>
    %49 = arith.addf %47, %48 : vector<8x32xf32>
    %50 = math.tanh %49 : vector<8x32xf32>
    %51 = arith.mulf %44, %50 : vector<8x32xf32>
    %c1_i32 = arith.constant 1 : i32
    %52 = arith.index_cast %c1_i32 : i32 to index
    %c0_22 = arith.constant 0 : index
    %c0_23 = arith.constant 0 : index
    %53 = vector.load %arg10[%52, %c0_22, %c0_23] : memref<8x8x128xf32, #tpu.memory_space<vmem>>, vector<1x8x128xf32>
    %54 = vector.shape_cast %53 : vector<1x8x128xf32> to vector<8x128xf32>
    %cst_24 = arith.constant dense<0.000000e+00> : vector<8x128xf32>
    %55 = tpu.matmul %32, %9, %cst_24 {dimension_numbers = #tpu.dot_dimension_numbers<[1], [0], [0], [1], [0, 0, 1, 1], [], []>} : vector<8x32xf32>, vector<32x128xf32>, vector<8x128xf32> -> vector<8x128xf32>
    %56 = arith.addf %54, %55 : vector<8x128xf32>
    %57 = arith.negf %56 : vector<8x128xf32>
    %58 = math.exp %57 : vector<8x128xf32>
    %cst_25 = arith.constant 1.000000e+00 : f32
    %59 = vector.broadcast %cst_25 : f32 to vector<8x128xf32>
    %60 = arith.addf %59, %58 : vector<8x128xf32>
    %61 = arith.divf %59, %60 : vector<8x128xf32>
    %62 = vector.extract_strided_slice %61 {offsets = [0, 0], sizes = [8, 32], strides = [1, 1]} : vector<8x128xf32> to vector<8x32xf32>
    %63 = vector.extract_strided_slice %61 {offsets = [0, 32], sizes = [8, 32], strides = [1, 1]} : vector<8x128xf32> to vector<8x32xf32>
    %64 = vector.extract_strided_slice %61 {offsets = [0, 96], sizes = [8, 32], strides = [1, 1]} : vector<8x128xf32> to vector<8x32xf32>
    %65 = vector.extract_strided_slice %56 {offsets = [0, 64], sizes = [8, 32], strides = [1, 1]} : vector<8x128xf32> to vector<8x32xf32>
    %66 = math.tanh %65 : vector<8x32xf32>
    %67 = arith.mulf %63, %30 : vector<8x32xf32>
    %68 = arith.mulf %62, %66 : vector<8x32xf32>
    %69 = arith.addf %67, %68 : vector<8x32xf32>
    %70 = math.tanh %69 : vector<8x32xf32>
    %71 = arith.mulf %64, %70 : vector<8x32xf32>
    %72 = tpu.concatenate %71, %51 in 1 : vector<8x32xf32>, vector<8x32xf32> -> vector<8x64xf32>
    %cst_26 = arith.constant dense<0.000000e+00> : vector<8x128xf32>
    %73 = tpu.matmul %72, %10, %cst_26 {dimension_numbers = #tpu.dot_dimension_numbers<[1], [0], [0], [1], [0, 0, 1, 1], [], []>} : vector<8x64xf32>, vector<64x128xf32>, vector<8x128xf32> -> vector<8x128xf32>
    %74 = vector.broadcast %11 : vector<1x128xf32> to vector<8x128xf32>
    %75 = arith.addf %73, %74 : vector<8x128xf32>
    %76 = arith.negf %75 : vector<8x128xf32>
    %77 = math.exp %76 : vector<8x128xf32>
    %cst_27 = arith.constant 1.000000e+00 : f32
    %78 = vector.broadcast %cst_27 : f32 to vector<8x128xf32>
    %79 = arith.addf %78, %77 : vector<8x128xf32>
    %80 = arith.divf %78, %79 : vector<8x128xf32>
    %81 = vector.extract_strided_slice %80 {offsets = [0, 0], sizes = [8, 32], strides = [1, 1]} : vector<8x128xf32> to vector<8x32xf32>
    %82 = vector.extract_strided_slice %80 {offsets = [0, 32], sizes = [8, 32], strides = [1, 1]} : vector<8x128xf32> to vector<8x32xf32>
    %83 = vector.extract_strided_slice %80 {offsets = [0, 96], sizes = [8, 32], strides = [1, 1]} : vector<8x128xf32> to vector<8x32xf32>
    %84 = vector.extract_strided_slice %75 {offsets = [0, 64], sizes = [8, 32], strides = [1, 1]} : vector<8x128xf32> to vector<8x32xf32>
    %85 = math.tanh %84 : vector<8x32xf32>
    %86 = arith.mulf %82, %49 : vector<8x32xf32>
    %87 = arith.mulf %81, %85 : vector<8x32xf32>
    %88 = arith.addf %86, %87 : vector<8x32xf32>
    %89 = math.tanh %88 : vector<8x32xf32>
    %90 = arith.mulf %83, %89 : vector<8x32xf32>
    %c2_i32 = arith.constant 2 : i32
    %91 = arith.index_cast %c2_i32 : i32 to index
    %c0_28 = arith.constant 0 : index
    %c0_29 = arith.constant 0 : index
    %92 = vector.load %arg10[%91, %c0_28, %c0_29] : memref<8x8x128xf32, #tpu.memory_space<vmem>>, vector<1x8x128xf32>
    %93 = vector.shape_cast %92 : vector<1x8x128xf32> to vector<8x128xf32>
    %cst_30 = arith.constant dense<0.000000e+00> : vector<8x128xf32>
    %94 = tpu.matmul %71, %9, %cst_30 {dimension_numbers = #tpu.dot_dimension_numbers<[1], [0], [0], [1], [0, 0, 1, 1], [], []>} : vector<8x32xf32>, vector<32x128xf32>, vector<8x128xf32> -> vector<8x128xf32>
    %95 = arith.addf %93, %94 : vector<8x128xf32>
    %96 = arith.negf %95 : vector<8x128xf32>
    %97 = math.exp %96 : vector<8x128xf32>
    %cst_31 = arith.constant 1.000000e+00 : f32
    %98 = vector.broadcast %cst_31 : f32 to vector<8x128xf32>
    %99 = arith.addf %98, %97 : vector<8x128xf32>
    %100 = arith.divf %98, %99 : vector<8x128xf32>
    %101 = vector.extract_strided_slice %100 {offsets = [0, 0], sizes = [8, 32], strides = [1, 1]} : vector<8x128xf32> to vector<8x32xf32>
    %102 = vector.extract_strided_slice %100 {offsets = [0, 32], sizes = [8, 32], strides = [1, 1]} : vector<8x128xf32> to vector<8x32xf32>
    %103 = vector.extract_strided_slice %100 {offsets = [0, 96], sizes = [8, 32], strides = [1, 1]} : vector<8x128xf32> to vector<8x32xf32>
    %104 = vector.extract_strided_slice %95 {offsets = [0, 64], sizes = [8, 32], strides = [1, 1]} : vector<8x128xf32> to vector<8x32xf32>
    %105 = math.tanh %104 : vector<8x32xf32>
    %106 = arith.mulf %102, %69 : vector<8x32xf32>
    %107 = arith.mulf %101, %105 : vector<8x32xf32>
    %108 = arith.addf %106, %107 : vector<8x32xf32>
    %109 = math.tanh %108 : vector<8x32xf32>
    %110 = arith.mulf %103, %109 : vector<8x32xf32>
    %111 = tpu.concatenate %110, %90 in 1 : vector<8x32xf32>, vector<8x32xf32> -> vector<8x64xf32>
    %cst_32 = arith.constant dense<0.000000e+00> : vector<8x128xf32>
    %112 = tpu.matmul %111, %10, %cst_32 {dimension_numbers = #tpu.dot_dimension_numbers<[1], [0], [0], [1], [0, 0, 1, 1], [], []>} : vector<8x64xf32>, vector<64x128xf32>, vector<8x128xf32> -> vector<8x128xf32>
    %113 = vector.broadcast %11 : vector<1x128xf32> to vector<8x128xf32>
    %114 = arith.addf %112, %113 : vector<8x128xf32>
    %115 = arith.negf %114 : vector<8x128xf32>
    %116 = math.exp %115 : vector<8x128xf32>
    %cst_33 = arith.constant 1.000000e+00 : f32
    %117 = vector.broadcast %cst_33 : f32 to vector<8x128xf32>
    %118 = arith.addf %117, %116 : vector<8x128xf32>
    %119 = arith.divf %117, %118 : vector<8x128xf32>
    %120 = vector.extract_strided_slice %119 {offsets = [0, 0], sizes = [8, 32], strides = [1, 1]} : vector<8x128xf32> to vector<8x32xf32>
    %121 = vector.extract_strided_slice %119 {offsets = [0, 32], sizes = [8, 32], strides = [1, 1]} : vector<8x128xf32> to vector<8x32xf32>
    %122 = vector.extract_strided_slice %119 {offsets = [0, 96], sizes = [8, 32], strides = [1, 1]} : vector<8x128xf32> to vector<8x32xf32>
    %123 = vector.extract_strided_slice %114 {offsets = [0, 64], sizes = [8, 32], strides = [1, 1]} : vector<8x128xf32> to vector<8x32xf32>
    %124 = math.tanh %123 : vector<8x32xf32>
    %125 = arith.mulf %121, %88 : vector<8x32xf32>
    %126 = arith.mulf %120, %124 : vector<8x32xf32>
    %127 = arith.addf %125, %126 : vector<8x32xf32>
    %128 = math.tanh %127 : vector<8x32xf32>
    %129 = arith.mulf %122, %128 : vector<8x32xf32>
    %c3_i32 = arith.constant 3 : i32
    %130 = arith.index_cast %c3_i32 : i32 to index
    %c0_34 = arith.constant 0 : index
    %c0_35 = arith.constant 0 : index
    %131 = vector.load %arg10[%130, %c0_34, %c0_35] : memref<8x8x128xf32, #tpu.memory_space<vmem>>, vector<1x8x128xf32>
    %132 = vector.shape_cast %131 : vector<1x8x128xf32> to vector<8x128xf32>
    %cst_36 = arith.constant dense<0.000000e+00> : vector<8x128xf32>
    %133 = tpu.matmul %110, %9, %cst_36 {dimension_numbers = #tpu.dot_dimension_numbers<[1], [0], [0], [1], [0, 0, 1, 1], [], []>} : vector<8x32xf32>, vector<32x128xf32>, vector<8x128xf32> -> vector<8x128xf32>
    %134 = arith.addf %132, %133 : vector<8x128xf32>
    %135 = arith.negf %134 : vector<8x128xf32>
    %136 = math.exp %135 : vector<8x128xf32>
    %cst_37 = arith.constant 1.000000e+00 : f32
    %137 = vector.broadcast %cst_37 : f32 to vector<8x128xf32>
    %138 = arith.addf %137, %136 : vector<8x128xf32>
    %139 = arith.divf %137, %138 : vector<8x128xf32>
    %140 = vector.extract_strided_slice %139 {offsets = [0, 0], sizes = [8, 32], strides = [1, 1]} : vector<8x128xf32> to vector<8x32xf32>
    %141 = vector.extract_strided_slice %139 {offsets = [0, 32], sizes = [8, 32], strides = [1, 1]} : vector<8x128xf32> to vector<8x32xf32>
    %142 = vector.extract_strided_slice %139 {offsets = [0, 96], sizes = [8, 32], strides = [1, 1]} : vector<8x128xf32> to vector<8x32xf32>
    %143 = vector.extract_strided_slice %134 {offsets = [0, 64], sizes = [8, 32], strides = [1, 1]} : vector<8x128xf32> to vector<8x32xf32>
    %144 = math.tanh %143 : vector<8x32xf32>
    %145 = arith.mulf %141, %108 : vector<8x32xf32>
    %146 = arith.mulf %140, %144 : vector<8x32xf32>
    %147 = arith.addf %145, %146 : vector<8x32xf32>
    %148 = math.tanh %147 : vector<8x32xf32>
    %149 = arith.mulf %142, %148 : vector<8x32xf32>
    %150 = tpu.concatenate %149, %129 in 1 : vector<8x32xf32>, vector<8x32xf32> -> vector<8x64xf32>
    %cst_38 = arith.constant dense<0.000000e+00> : vector<8x128xf32>
    %151 = tpu.matmul %150, %10, %cst_38 {dimension_numbers = #tpu.dot_dimension_numbers<[1], [0], [0], [1], [0, 0, 1, 1], [], []>} : vector<8x64xf32>, vector<64x128xf32>, vector<8x128xf32> -> vector<8x128xf32>
    %152 = vector.broadcast %11 : vector<1x128xf32> to vector<8x128xf32>
    %153 = arith.addf %151, %152 : vector<8x128xf32>
    %154 = arith.negf %153 : vector<8x128xf32>
    %155 = math.exp %154 : vector<8x128xf32>
    %cst_39 = arith.constant 1.000000e+00 : f32
    %156 = vector.broadcast %cst_39 : f32 to vector<8x128xf32>
    %157 = arith.addf %156, %155 : vector<8x128xf32>
    %158 = arith.divf %156, %157 : vector<8x128xf32>
    %159 = vector.extract_strided_slice %158 {offsets = [0, 0], sizes = [8, 32], strides = [1, 1]} : vector<8x128xf32> to vector<8x32xf32>
    %160 = vector.extract_strided_slice %158 {offsets = [0, 32], sizes = [8, 32], strides = [1, 1]} : vector<8x128xf32> to vector<8x32xf32>
    %161 = vector.extract_strided_slice %158 {offsets = [0, 96], sizes = [8, 32], strides = [1, 1]} : vector<8x128xf32> to vector<8x32xf32>
    %162 = vector.extract_strided_slice %153 {offsets = [0, 64], sizes = [8, 32], strides = [1, 1]} : vector<8x128xf32> to vector<8x32xf32>
    %163 = math.tanh %162 : vector<8x32xf32>
    %164 = arith.mulf %160, %127 : vector<8x32xf32>
    %165 = arith.mulf %159, %163 : vector<8x32xf32>
    %166 = arith.addf %164, %165 : vector<8x32xf32>
    %167 = math.tanh %166 : vector<8x32xf32>
    %168 = arith.mulf %161, %167 : vector<8x32xf32>
    %c4_i32 = arith.constant 4 : i32
    %169 = arith.index_cast %c4_i32 : i32 to index
    %c0_40 = arith.constant 0 : index
    %c0_41 = arith.constant 0 : index
    %170 = vector.load %arg10[%169, %c0_40, %c0_41] : memref<8x8x128xf32, #tpu.memory_space<vmem>>, vector<1x8x128xf32>
    %171 = vector.shape_cast %170 : vector<1x8x128xf32> to vector<8x128xf32>
    %cst_42 = arith.constant dense<0.000000e+00> : vector<8x128xf32>
    %172 = tpu.matmul %149, %9, %cst_42 {dimension_numbers = #tpu.dot_dimension_numbers<[1], [0], [0], [1], [0, 0, 1, 1], [], []>} : vector<8x32xf32>, vector<32x128xf32>, vector<8x128xf32> -> vector<8x128xf32>
    %173 = arith.addf %171, %172 : vector<8x128xf32>
    %174 = arith.negf %173 : vector<8x128xf32>
    %175 = math.exp %174 : vector<8x128xf32>
    %cst_43 = arith.constant 1.000000e+00 : f32
    %176 = vector.broadcast %cst_43 : f32 to vector<8x128xf32>
    %177 = arith.addf %176, %175 : vector<8x128xf32>
    %178 = arith.divf %176, %177 : vector<8x128xf32>
    %179 = vector.extract_strided_slice %178 {offsets = [0, 0], sizes = [8, 32], strides = [1, 1]} : vector<8x128xf32> to vector<8x32xf32>
    %180 = vector.extract_strided_slice %178 {offsets = [0, 32], sizes = [8, 32], strides = [1, 1]} : vector<8x128xf32> to vector<8x32xf32>
    %181 = vector.extract_strided_slice %178 {offsets = [0, 96], sizes = [8, 32], strides = [1, 1]} : vector<8x128xf32> to vector<8x32xf32>
    %182 = vector.extract_strided_slice %173 {offsets = [0, 64], sizes = [8, 32], strides = [1, 1]} : vector<8x128xf32> to vector<8x32xf32>
    %183 = math.tanh %182 : vector<8x32xf32>
    %184 = arith.mulf %180, %147 : vector<8x32xf32>
    %185 = arith.mulf %179, %183 : vector<8x32xf32>
    %186 = arith.addf %184, %185 : vector<8x32xf32>
    %187 = math.tanh %186 : vector<8x32xf32>
    %188 = arith.mulf %181, %187 : vector<8x32xf32>
    %189 = tpu.concatenate %188, %168 in 1 : vector<8x32xf32>, vector<8x32xf32> -> vector<8x64xf32>
    %cst_44 = arith.constant dense<0.000000e+00> : vector<8x128xf32>
    %190 = tpu.matmul %189, %10, %cst_44 {dimension_numbers = #tpu.dot_dimension_numbers<[1], [0], [0], [1], [0, 0, 1, 1], [], []>} : vector<8x64xf32>, vector<64x128xf32>, vector<8x128xf32> -> vector<8x128xf32>
    %191 = vector.broadcast %11 : vector<1x128xf32> to vector<8x128xf32>
    %192 = arith.addf %190, %191 : vector<8x128xf32>
    %193 = arith.negf %192 : vector<8x128xf32>
    %194 = math.exp %193 : vector<8x128xf32>
    %cst_45 = arith.constant 1.000000e+00 : f32
    %195 = vector.broadcast %cst_45 : f32 to vector<8x128xf32>
    %196 = arith.addf %195, %194 : vector<8x128xf32>
    %197 = arith.divf %195, %196 : vector<8x128xf32>
    %198 = vector.extract_strided_slice %197 {offsets = [0, 0], sizes = [8, 32], strides = [1, 1]} : vector<8x128xf32> to vector<8x32xf32>
    %199 = vector.extract_strided_slice %197 {offsets = [0, 32], sizes = [8, 32], strides = [1, 1]} : vector<8x128xf32> to vector<8x32xf32>
    %200 = vector.extract_strided_slice %197 {offsets = [0, 96], sizes = [8, 32], strides = [1, 1]} : vector<8x128xf32> to vector<8x32xf32>
    %201 = vector.extract_strided_slice %192 {offsets = [0, 64], sizes = [8, 32], strides = [1, 1]} : vector<8x128xf32> to vector<8x32xf32>
    %202 = math.tanh %201 : vector<8x32xf32>
    %203 = arith.mulf %199, %166 : vector<8x32xf32>
    %204 = arith.mulf %198, %202 : vector<8x32xf32>
    %205 = arith.addf %203, %204 : vector<8x32xf32>
    %206 = math.tanh %205 : vector<8x32xf32>
    %207 = arith.mulf %200, %206 : vector<8x32xf32>
    %c5_i32 = arith.constant 5 : i32
    %208 = arith.index_cast %c5_i32 : i32 to index
    %c0_46 = arith.constant 0 : index
    %c0_47 = arith.constant 0 : index
    %209 = vector.load %arg10[%208, %c0_46, %c0_47] : memref<8x8x128xf32, #tpu.memory_space<vmem>>, vector<1x8x128xf32>
    %210 = vector.shape_cast %209 : vector<1x8x128xf32> to vector<8x128xf32>
    %cst_48 = arith.constant dense<0.000000e+00> : vector<8x128xf32>
    %211 = tpu.matmul %188, %9, %cst_48 {dimension_numbers = #tpu.dot_dimension_numbers<[1], [0], [0], [1], [0, 0, 1, 1], [], []>} : vector<8x32xf32>, vector<32x128xf32>, vector<8x128xf32> -> vector<8x128xf32>
    %212 = arith.addf %210, %211 : vector<8x128xf32>
    %213 = arith.negf %212 : vector<8x128xf32>
    %214 = math.exp %213 : vector<8x128xf32>
    %cst_49 = arith.constant 1.000000e+00 : f32
    %215 = vector.broadcast %cst_49 : f32 to vector<8x128xf32>
    %216 = arith.addf %215, %214 : vector<8x128xf32>
    %217 = arith.divf %215, %216 : vector<8x128xf32>
    %218 = vector.extract_strided_slice %217 {offsets = [0, 0], sizes = [8, 32], strides = [1, 1]} : vector<8x128xf32> to vector<8x32xf32>
    %219 = vector.extract_strided_slice %217 {offsets = [0, 32], sizes = [8, 32], strides = [1, 1]} : vector<8x128xf32> to vector<8x32xf32>
    %220 = vector.extract_strided_slice %217 {offsets = [0, 96], sizes = [8, 32], strides = [1, 1]} : vector<8x128xf32> to vector<8x32xf32>
    %221 = vector.extract_strided_slice %212 {offsets = [0, 64], sizes = [8, 32], strides = [1, 1]} : vector<8x128xf32> to vector<8x32xf32>
    %222 = math.tanh %221 : vector<8x32xf32>
    %223 = arith.mulf %219, %186 : vector<8x32xf32>
    %224 = arith.mulf %218, %222 : vector<8x32xf32>
    %225 = arith.addf %223, %224 : vector<8x32xf32>
    %226 = math.tanh %225 : vector<8x32xf32>
    %227 = arith.mulf %220, %226 : vector<8x32xf32>
    %228 = tpu.concatenate %227, %207 in 1 : vector<8x32xf32>, vector<8x32xf32> -> vector<8x64xf32>
    %cst_50 = arith.constant dense<0.000000e+00> : vector<8x128xf32>
    %229 = tpu.matmul %228, %10, %cst_50 {dimension_numbers = #tpu.dot_dimension_numbers<[1], [0], [0], [1], [0, 0, 1, 1], [], []>} : vector<8x64xf32>, vector<64x128xf32>, vector<8x128xf32> -> vector<8x128xf32>
    %230 = vector.broadcast %11 : vector<1x128xf32> to vector<8x128xf32>
    %231 = arith.addf %229, %230 : vector<8x128xf32>
    %232 = arith.negf %231 : vector<8x128xf32>
    %233 = math.exp %232 : vector<8x128xf32>
    %cst_51 = arith.constant 1.000000e+00 : f32
    %234 = vector.broadcast %cst_51 : f32 to vector<8x128xf32>
    %235 = arith.addf %234, %233 : vector<8x128xf32>
    %236 = arith.divf %234, %235 : vector<8x128xf32>
    %237 = vector.extract_strided_slice %236 {offsets = [0, 0], sizes = [8, 32], strides = [1, 1]} : vector<8x128xf32> to vector<8x32xf32>
    %238 = vector.extract_strided_slice %236 {offsets = [0, 32], sizes = [8, 32], strides = [1, 1]} : vector<8x128xf32> to vector<8x32xf32>
    %239 = vector.extract_strided_slice %236 {offsets = [0, 96], sizes = [8, 32], strides = [1, 1]} : vector<8x128xf32> to vector<8x32xf32>
    %240 = vector.extract_strided_slice %231 {offsets = [0, 64], sizes = [8, 32], strides = [1, 1]} : vector<8x128xf32> to vector<8x32xf32>
    %241 = math.tanh %240 : vector<8x32xf32>
    %242 = arith.mulf %238, %205 : vector<8x32xf32>
    %243 = arith.mulf %237, %241 : vector<8x32xf32>
    %244 = arith.addf %242, %243 : vector<8x32xf32>
    %245 = math.tanh %244 : vector<8x32xf32>
    %246 = arith.mulf %239, %245 : vector<8x32xf32>
    %c6_i32 = arith.constant 6 : i32
    %247 = arith.index_cast %c6_i32 : i32 to index
    %c0_52 = arith.constant 0 : index
    %c0_53 = arith.constant 0 : index
    %248 = vector.load %arg10[%247, %c0_52, %c0_53] : memref<8x8x128xf32, #tpu.memory_space<vmem>>, vector<1x8x128xf32>
    %249 = vector.shape_cast %248 : vector<1x8x128xf32> to vector<8x128xf32>
    %cst_54 = arith.constant dense<0.000000e+00> : vector<8x128xf32>
    %250 = tpu.matmul %227, %9, %cst_54 {dimension_numbers = #tpu.dot_dimension_numbers<[1], [0], [0], [1], [0, 0, 1, 1], [], []>} : vector<8x32xf32>, vector<32x128xf32>, vector<8x128xf32> -> vector<8x128xf32>
    %251 = arith.addf %249, %250 : vector<8x128xf32>
    %252 = arith.negf %251 : vector<8x128xf32>
    %253 = math.exp %252 : vector<8x128xf32>
    %cst_55 = arith.constant 1.000000e+00 : f32
    %254 = vector.broadcast %cst_55 : f32 to vector<8x128xf32>
    %255 = arith.addf %254, %253 : vector<8x128xf32>
    %256 = arith.divf %254, %255 : vector<8x128xf32>
    %257 = vector.extract_strided_slice %256 {offsets = [0, 0], sizes = [8, 32], strides = [1, 1]} : vector<8x128xf32> to vector<8x32xf32>
    %258 = vector.extract_strided_slice %256 {offsets = [0, 32], sizes = [8, 32], strides = [1, 1]} : vector<8x128xf32> to vector<8x32xf32>
    %259 = vector.extract_strided_slice %256 {offsets = [0, 96], sizes = [8, 32], strides = [1, 1]} : vector<8x128xf32> to vector<8x32xf32>
    %260 = vector.extract_strided_slice %251 {offsets = [0, 64], sizes = [8, 32], strides = [1, 1]} : vector<8x128xf32> to vector<8x32xf32>
    %261 = math.tanh %260 : vector<8x32xf32>
    %262 = arith.mulf %258, %225 : vector<8x32xf32>
    %263 = arith.mulf %257, %261 : vector<8x32xf32>
    %264 = arith.addf %262, %263 : vector<8x32xf32>
    %265 = math.tanh %264 : vector<8x32xf32>
    %266 = arith.mulf %259, %265 : vector<8x32xf32>
    %267 = tpu.concatenate %266, %246 in 1 : vector<8x32xf32>, vector<8x32xf32> -> vector<8x64xf32>
    %cst_56 = arith.constant dense<0.000000e+00> : vector<8x128xf32>
    %268 = tpu.matmul %267, %10, %cst_56 {dimension_numbers = #tpu.dot_dimension_numbers<[1], [0], [0], [1], [0, 0, 1, 1], [], []>} : vector<8x64xf32>, vector<64x128xf32>, vector<8x128xf32> -> vector<8x128xf32>
    %269 = vector.broadcast %11 : vector<1x128xf32> to vector<8x128xf32>
    %270 = arith.addf %268, %269 : vector<8x128xf32>
    %271 = arith.negf %270 : vector<8x128xf32>
    %272 = math.exp %271 : vector<8x128xf32>
    %cst_57 = arith.constant 1.000000e+00 : f32
    %273 = vector.broadcast %cst_57 : f32 to vector<8x128xf32>
    %274 = arith.addf %273, %272 : vector<8x128xf32>
    %275 = arith.divf %273, %274 : vector<8x128xf32>
    %276 = vector.extract_strided_slice %275 {offsets = [0, 0], sizes = [8, 32], strides = [1, 1]} : vector<8x128xf32> to vector<8x32xf32>
    %277 = vector.extract_strided_slice %275 {offsets = [0, 32], sizes = [8, 32], strides = [1, 1]} : vector<8x128xf32> to vector<8x32xf32>
    %278 = vector.extract_strided_slice %275 {offsets = [0, 96], sizes = [8, 32], strides = [1, 1]} : vector<8x128xf32> to vector<8x32xf32>
    %279 = vector.extract_strided_slice %270 {offsets = [0, 64], sizes = [8, 32], strides = [1, 1]} : vector<8x128xf32> to vector<8x32xf32>
    %280 = math.tanh %279 : vector<8x32xf32>
    %281 = arith.mulf %277, %244 : vector<8x32xf32>
    %282 = arith.mulf %276, %280 : vector<8x32xf32>
    %283 = arith.addf %281, %282 : vector<8x32xf32>
    %284 = math.tanh %283 : vector<8x32xf32>
    %285 = arith.mulf %278, %284 : vector<8x32xf32>
    %c7_i32 = arith.constant 7 : i32
    %286 = arith.index_cast %c7_i32 : i32 to index
    %c0_58 = arith.constant 0 : index
    %c0_59 = arith.constant 0 : index
    %287 = vector.load %arg10[%286, %c0_58, %c0_59] : memref<8x8x128xf32, #tpu.memory_space<vmem>>, vector<1x8x128xf32>
    %288 = vector.shape_cast %287 : vector<1x8x128xf32> to vector<8x128xf32>
    %cst_60 = arith.constant dense<0.000000e+00> : vector<8x128xf32>
    %289 = tpu.matmul %266, %9, %cst_60 {dimension_numbers = #tpu.dot_dimension_numbers<[1], [0], [0], [1], [0, 0, 1, 1], [], []>} : vector<8x32xf32>, vector<32x128xf32>, vector<8x128xf32> -> vector<8x128xf32>
    %290 = arith.addf %288, %289 : vector<8x128xf32>
    %291 = arith.negf %290 : vector<8x128xf32>
    %292 = math.exp %291 : vector<8x128xf32>
    %cst_61 = arith.constant 1.000000e+00 : f32
    %293 = vector.broadcast %cst_61 : f32 to vector<8x128xf32>
    %294 = arith.addf %293, %292 : vector<8x128xf32>
    %295 = arith.divf %293, %294 : vector<8x128xf32>
    %296 = vector.extract_strided_slice %295 {offsets = [0, 0], sizes = [8, 32], strides = [1, 1]} : vector<8x128xf32> to vector<8x32xf32>
    %297 = vector.extract_strided_slice %295 {offsets = [0, 32], sizes = [8, 32], strides = [1, 1]} : vector<8x128xf32> to vector<8x32xf32>
    %298 = vector.extract_strided_slice %295 {offsets = [0, 96], sizes = [8, 32], strides = [1, 1]} : vector<8x128xf32> to vector<8x32xf32>
    %299 = vector.extract_strided_slice %290 {offsets = [0, 64], sizes = [8, 32], strides = [1, 1]} : vector<8x128xf32> to vector<8x32xf32>
    %300 = math.tanh %299 : vector<8x32xf32>
    %301 = arith.mulf %297, %264 : vector<8x32xf32>
    %302 = arith.mulf %296, %300 : vector<8x32xf32>
    %303 = arith.addf %301, %302 : vector<8x32xf32>
    %304 = math.tanh %303 : vector<8x32xf32>
    %305 = arith.mulf %298, %304 : vector<8x32xf32>
    %306 = tpu.concatenate %305, %285 in 1 : vector<8x32xf32>, vector<8x32xf32> -> vector<8x64xf32>
    %cst_62 = arith.constant dense<0.000000e+00> : vector<8x128xf32>
    %307 = tpu.matmul %306, %10, %cst_62 {dimension_numbers = #tpu.dot_dimension_numbers<[1], [0], [0], [1], [0, 0, 1, 1], [], []>} : vector<8x64xf32>, vector<64x128xf32>, vector<8x128xf32> -> vector<8x128xf32>
    %308 = vector.broadcast %11 : vector<1x128xf32> to vector<8x128xf32>
    %309 = arith.addf %307, %308 : vector<8x128xf32>
    %310 = arith.negf %309 : vector<8x128xf32>
    %311 = math.exp %310 : vector<8x128xf32>
    %cst_63 = arith.constant 1.000000e+00 : f32
    %312 = vector.broadcast %cst_63 : f32 to vector<8x128xf32>
    %313 = arith.addf %312, %311 : vector<8x128xf32>
    %314 = arith.divf %312, %313 : vector<8x128xf32>
    %315 = vector.extract_strided_slice %314 {offsets = [0, 0], sizes = [8, 32], strides = [1, 1]} : vector<8x128xf32> to vector<8x32xf32>
    %316 = vector.extract_strided_slice %314 {offsets = [0, 32], sizes = [8, 32], strides = [1, 1]} : vector<8x128xf32> to vector<8x32xf32>
    %317 = vector.extract_strided_slice %314 {offsets = [0, 96], sizes = [8, 32], strides = [1, 1]} : vector<8x128xf32> to vector<8x32xf32>
    %318 = vector.extract_strided_slice %309 {offsets = [0, 64], sizes = [8, 32], strides = [1, 1]} : vector<8x128xf32> to vector<8x32xf32>
    %319 = math.tanh %318 : vector<8x32xf32>
    %320 = arith.mulf %316, %283 : vector<8x32xf32>
    %321 = arith.mulf %315, %319 : vector<8x32xf32>
    %322 = arith.addf %320, %321 : vector<8x32xf32>
    %323 = math.tanh %322 : vector<8x32xf32>
    %324 = arith.mulf %317, %323 : vector<8x32xf32>
    %c8_i32 = arith.constant 8 : i32
    %c0_64 = arith.constant 0 : index
    %c0_65 = arith.constant 0 : index
    %325 = vector.load %arg7[%c0_64, %c0_65] : memref<32x1xf32, #tpu.memory_space<vmem>>, vector<32x1xf32>
    %cst_66 = arith.constant dense<0.000000e+00> : vector<8x1xf32>
    %326 = tpu.matmul %324, %325, %cst_66 {dimension_numbers = #tpu.dot_dimension_numbers<[1], [0], [0], [1], [0, 0, 1, 1], [], []>} : vector<8x32xf32>, vector<32x1xf32>, vector<8x1xf32> -> vector<8x1xf32>
    %c0_67 = arith.constant 0 : index
    %c0_68 = arith.constant 0 : index
    %327 = vector.load %arg8[%c0_67, %c0_68] : memref<1x1xf32, #tpu.memory_space<vmem>>, vector<1x1xf32>
    %328 = vector.broadcast %327 : vector<1x1xf32> to vector<8x1xf32>
    %329 = arith.addf %326, %328 : vector<8x1xf32>
    %c0_69 = arith.constant 0 : index
    %c0_70 = arith.constant 0 : index
    %330 = vector.load %arg9[%c0_69, %c0_70] : memref<8x1xf32, #tpu.memory_space<vmem>>, vector<8x1xf32>
    tpu.vector_store %arg9[%c0_69, %c0_70], %329 {strides = array<i32>} : memref<8x1xf32, #tpu.memory_space<vmem>>, vector<8x1xf32>,
    return
  }
  func.func @transform_0(%arg0: i32) -> (i32, i32, i32) {
    %c0_i32 = arith.constant 0 : i32
    %c0_i32_0 = arith.constant 0 : i32
    %c0_i32_1 = arith.constant 0 : i32
    return %c0_i32, %arg0, %c0_i32_0 : i32, i32, i32
  }
  func.func @transform_1(%arg0: i32) -> (i32, i32) {
    %c0_i32 = arith.constant 0 : i32
    %c0_i32_0 = arith.constant 0 : i32
    %c0_i32_1 = arith.constant 0 : i32
    return %c0_i32, %c0_i32_0 : i32, i32
  }
  func.func @transform_2(%arg0: i32) -> (i32, i32) {
    %c0_i32 = arith.constant 0 : i32
    %c0_i32_0 = arith.constant 0 : i32
    %c0_i32_1 = arith.constant 0 : i32
    return %c0_i32, %c0_i32_0 : i32, i32
  }
  func.func @transform_3(%arg0: i32) -> (i32, i32) {
    %c0_i32 = arith.constant 0 : i32
    %c0_i32_0 = arith.constant 0 : i32
    %c0_i32_1 = arith.constant 0 : i32
    return %c0_i32, %c0_i32_0 : i32, i32
  }
  func.func @transform_4(%arg0: i32) -> (i32, i32) {
    %c0_i32 = arith.constant 0 : i32
    %c0_i32_0 = arith.constant 0 : i32
    %c0_i32_1 = arith.constant 0 : i32
    return %c0_i32, %c0_i32_0 : i32, i32
  }
  func.func @transform_5(%arg0: i32) -> (i32, i32) {
    %c0_i32 = arith.constant 0 : i32
    %c0_i32_0 = arith.constant 0 : i32
    %c0_i32_1 = arith.constant 0 : i32
    return %c0_i32, %c0_i32_0 : i32, i32
  }
  func.func @transform_6(%arg0: i32) -> (i32, i32) {
    %c0_i32 = arith.constant 0 : i32
    %c0_i32_0 = arith.constant 0 : i32
    %c0_i32_1 = arith.constant 0 : i32
    return %c0_i32, %c0_i32_0 : i32, i32
  }
  func.func @transform_7(%arg0: i32) -> (i32, i32) {
    %c0_i32 = arith.constant 0 : i32
    %c0_i32_0 = arith.constant 0 : i32
    %c0_i32_1 = arith.constant 0 : i32
    return %c0_i32, %c0_i32_0 : i32, i32
  }
  func.func @transform_8(%arg0: i32) -> (i32, i32) {
    %c0_i32 = arith.constant 0 : i32
    %c0_i32_0 = arith.constant 0 : i32
    return %arg0, %c0_i32 : i32, i32
  }
}

</mosaic_0001>

<llo_original>
// kernel: lstm_model_forward.1
$region0: #{lstm_model_forward.1}
  #allocation0 [shape = 'u32[]', space=smem, size = 0x4, offset = 0x4, fixed_abs, tag = 'smem constant byte address 0x4 - core index']
  #allocation1 [shape = 'u32[144,128]{1,0:T(1,128)}', space=vmem, size = 0x12000, scoped, tag = 'internal scratch']
  #allocation2 [shape = 'f32[8,8,128]{2,1,0:T(8,128)}', space=vmem, size = 0x8000, scoped, tag = 'scratch operand']
  #allocation3 [shape = 'f32[1,1]{1,0:T(1,128)S(1)}', space=vmem, size = 0x200, scoped, tag = 'scoped memory for lstm_model_forward.1']
  %s0 = inlined_call_operand.vmem [shape: f32[8,8,4], index: 0, kind: input, shape index: {}]
  %s1 = inlined_call_operand.vmem [shape: f32[4,128], index: 1, kind: input, shape index: {}]
  %s2 = inlined_call_operand.vmem [shape: f32[32,128], index: 2, kind: input, shape index: {}]
  %s3 = inlined_call_operand.vmem [shape: f32[1,128], index: 3, kind: input, shape index: {}]
  %s4 = inlined_call_operand.vmem [shape: f32[64,128], index: 4, kind: input, shape index: {}]
  %s5 = inlined_call_operand.vmem [shape: f32[1,128], index: 5, kind: input, shape index: {}]
  %s6 = inlined_call_operand.vmem [shape: f32[32,1], index: 6, kind: input, shape index: {}]
  %s7 = inlined_call_operand.<no memory space> [shape: f32[1,1], index: 7, kind: input, shape index: {}]
  %s8 = inlined_call_operand.vmem [shape: f32[8,1], index: 8, kind: output, shape index: {}]
  %s9 = sld [smem:[#allocation0]]
  $region42: #{lstm_model_forward.1} parent=0
    _
  %s11 = ssub.s32 1, %s9
  %s12 = scalar_select 0, %s11, %s9
  %v13 = vstv %s7
  %14 = vst [vmem:[#allocation3] sm:$0x1] %v13
  // Predicated region
  $region2: #{lstm_model_forward.1} parent=0 // pred_check
    _
  $region3: #{lstm_model_forward.1} parent=0 // pred_check_branch
    %16 = sbr.rel (0) target = $region5
  $region4: #{lstm_model_forward.1} parent=0 // pred_region
    _
  $region5: #{lstm_model_forward.1} parent=0 // pred_fallthru
    _
  // Predicated region
  $region6: #{lstm_model_forward.1} parent=0 // pred_check
    _
  $region7: #{lstm_model_forward.1} parent=0 // pred_check_branch
    %18 = sbr.rel (0) target = $region9
  $region8: #{lstm_model_forward.1} parent=0 // pred_region
    _
  $region9: #{lstm_model_forward.1} parent=0 // pred_fallthru
    _
  // Predicated region
  $region10: #{lstm_model_forward.1} parent=0 // pred_check
    _
  $region11: #{lstm_model_forward.1} parent=0 // pred_check_branch
    %20 = sbr.rel (0) target = $region13
  $region12: #{lstm_model_forward.1} parent=0 // pred_region
    _
  $region13: #{lstm_model_forward.1} parent=0 // pred_fallthru
    _
  // Predicated region
  $region14: #{lstm_model_forward.1} parent=0 // pred_check
    _
  $region15: #{lstm_model_forward.1} parent=0 // pred_check_branch
    %22 = sbr.rel (0) target = $region17
  $region16: #{lstm_model_forward.1} parent=0 // pred_region
    _
  $region17: #{lstm_model_forward.1} parent=0 // pred_fallthru
    _
  // Predicated region
  $region18: #{lstm_model_forward.1} parent=0 // pred_check
    _
  $region19: #{lstm_model_forward.1} parent=0 // pred_check_branch
    %24 = sbr.rel (0) target = $region21
  $region20: #{lstm_model_forward.1} parent=0 // pred_region
    _
  $region21: #{lstm_model_forward.1} parent=0 // pred_fallthru
    _
  // Predicated region
  $region22: #{lstm_model_forward.1} parent=0 // pred_check
    _
  $region23: #{lstm_model_forward.1} parent=0 // pred_check_branch
    %26 = sbr.rel (0) target = $region25
  $region24: #{lstm_model_forward.1} parent=0 // pred_region
    _
  $region25: #{lstm_model_forward.1} parent=0 // pred_fallthru
    _
  // Predicated region
  $region26: #{lstm_model_forward.1} parent=0 // pred_check
    _
  $region27: #{lstm_model_forward.1} parent=0 // pred_check_branch
    %28 = sbr.rel (0) target = $region29
  $region28: #{lstm_model_forward.1} parent=0 // pred_region
    _
  $region29: #{lstm_model_forward.1} parent=0 // pred_fallthru
    _
  // Predicated region
  $region30: #{lstm_model_forward.1} parent=0 // pred_check
    _
  $region31: #{lstm_model_forward.1} parent=0 // pred_check_branch
    %30 = sbr.rel (0) target = $region33
  $region32: #{lstm_model_forward.1} parent=0 // pred_region
    _
  $region33: #{lstm_model_forward.1} parent=0 // pred_fallthru
    _
  %v31 = vld [vmem:[%s0] sm:$0xff]
  %v32 = vld [vmem:[%s0 + $0x8] sm:$0xff]
  %v33 = vld [vmem:[%s0 + $0x10] sm:$0xff]
  %v34 = vld [vmem:[%s0 + $0x18] sm:$0xff]
  %v35 = vld [vmem:[%s0 + $0x20] sm:$0xff]
  %v36 = vld [vmem:[%s0 + $0x28] sm:$0xff]
  %v37 = vld [vmem:[%s0 + $0x30] sm:$0xff]
  %v38 = vld [vmem:[%s0 + $0x38] sm:$0xff]
  %v39 = vld [vmem:[%s1] sm:$0xf]
  %v40 = vld [vmem:[%s3] sm:$0x1]
  %v42 = vlaneseq
  %v43 = vshrl.u32 %v42, 7
  %v44 = vsub.s32 0, %v43
  %v45 = vrot.slane %v40, %v44
  %vm47 = vcmask 31744
  %v49 = vsel %vm47, %v31, 0
  %v52 = vsel %vm47, %v32, 0
  %v55 = vsel %vm47, %v33, 0
  %v58 = vsel %vm47, %v34, 0
  %v61 = vsel %vm47, %v35, 0
  %v64 = vsel %vm47, %v36, 0
  %v67 = vsel %vm47, %v37, 0
  %v70 = vsel %vm47, %v38, 0
  %vm72 = vcmask 1043456
  %v74 = vsel %vm72, %v39, 0
  %76 = vmatprep.subr.mxu0 0.0
  %77 = vmatpush1.msra.mxu0 %v74
  %78 = vmatprep.subr.mxu0 0.0
  %79 = vmatpush1.msra.mxu0 0.0
  %80 = vmatprep.subr.mxu0 0.0
  %81 = vmatpush1.msra.mxu0 0.0
  %82 = vmatprep.subr.mxu0 0.0
  %83 = vmatpush1.msra.mxu0 0.0
  %84 = vmatprep.subr.mxu0 0.0
  %85 = vmatpush1.msra.mxu0 0.0
  %86 = vmatprep.subr.mxu0 0.0
  %87 = vmatpush1.msra.mxu0 0.0
  %88 = vmatprep.subr.mxu0 0.0
  %89 = vmatpush1.msra.mxu0 0.0
  %90 = vmatprep.subr.mxu0 0.0
  %91 = vmatpush1.msra.mxu0 0.0
  %92 = vmatprep.subr.mxu0 0.0
  %93 = vmatpush1.msra.mxu0 0.0
  %94 = vmatprep.subr.mxu0 0.0
  %95 = vmatpush1.msra.mxu0 0.0
  %96 = vmatprep.subr.mxu0 0.0
  %97 = vmatpush1.msra.mxu0 0.0
  %98 = vmatprep.subr.mxu0 0.0
  %99 = vmatpush1.msra.mxu0 0.0
  %100 = vmatprep.subr.mxu0 0.0
  %101 = vmatpush1.msra.mxu0 0.0
  %102 = vmatprep.subr.mxu0 0.0
  %103 = vmatpush1.msra.mxu0 0.0
  %104 = vmatprep.subr.mxu0 0.0
  %105 = vmatpush1.msra.mxu0 0.0
  %106 = vmatprep.subr.mxu0 0.0
  %107 = vmatpush1.msra.mxu0 0.0
  %108 = vmatprep.subr.mxu0 0.0
  %109 = vmatpush1.msra.mxu0 0.0
  %110 = vmatprep.subr.mxu0 0.0
  %111 = vmatpush1.msra.mxu0 0.0
  %112 = vmatprep.subr.mxu0 0.0
  %113 = vmatpush1.msra.mxu0 0.0
  %114 = vmatprep.subr.mxu0 0.0
  %115 = vmatpush1.msra.mxu0 0.0
  %116 = vmatprep.subr.mxu0 0.0
  %117 = vmatpush1.msra.mxu0 0.0
  %118 = vmatprep.subr.mxu0 0.0
  %119 = vmatpush1.msra.mxu0 0.0
  %120 = vmatprep.subr.mxu0 0.0
  %121 = vmatpush1.msra.mxu0 0.0
  %122 = vmatprep.subr.mxu0 0.0
  %123 = vmatpush1.msra.mxu0 0.0
  %124 = vmatprep.subr.mxu0 0.0
  %125 = vmatpush1.msra.mxu0 0.0
  %126 = vmatprep.subr.mxu0 0.0
  %127 = vmatpush1.msra.mxu0 0.0
  %128 = vmatprep.subr.mxu0 0.0
  %129 = vmatpush1.msra.mxu0 0.0
  %130 = vmatprep.subr.mxu0 0.0
  %131 = vmatpush1.msra.mxu0 0.0
  %132 = vmatprep.subr.mxu0 0.0
  %133 = vmatpush1.msra.mxu0 0.0
  %134 = vmatprep.subr.mxu0 0.0
  %135 = vmatpush1.msra.mxu0 0.0
  %136 = vmatprep.subr.mxu0 0.0
  %137 = vmatpush1.msra.mxu0 0.0
  %138 = vmatprep.subr.mxu0 0.0
  %139 = vmatpush1.msra.mxu0 0.0
  %140 = vmatprep.mubr.f32.mxu0 0.0
  %141 = vmatmul.mubr.f32.gmra.mrb[0].mxu0 %v49
  %v142 = vpop.f32.mrb[0].mxu0
  %v143 = vadd.f32 %v45, %v142
  %v144 = vpop.f32.mrb[0].mxu0
  %145 = vmatprep.mubr.f32.mxu0 0.0
  %146 = vmatmul.mubr.f32.gmra.mrb[0].mxu0 %v52
  %v147 = vpop.f32.mrb[0].mxu0
  %v148 = vadd.f32 %v45, %v147
  %v149 = vpop.f32.mrb[0].mxu0
  %150 = vmatprep.mubr.f32.mxu0 0.0
  %151 = vmatmul.mubr.f32.gmra.mrb[0].mxu0 %v55
  %v152 = vpop.f32.mrb[0].mxu0
  %v153 = vadd.f32 %v45, %v152
  %v154 = vpop.f32.mrb[0].mxu0
  %155 = vmatprep.mubr.f32.mxu0 0.0
  %156 = vmatmul.mubr.f32.gmra.mrb[0].mxu0 %v58
  %v157 = vpop.f32.mrb[0].mxu0
  %v158 = vadd.f32 %v45, %v157
  %v159 = vpop.f32.mrb[0].mxu0
  %160 = vmatprep.mubr.f32.mxu0 0.0
  %161 = vmatmul.mubr.f32.gmra.mrb[0].mxu0 %v61
  %v162 = vpop.f32.mrb[0].mxu0
  %v163 = vadd.f32 %v45, %v162
  %v164 = vpop.f32.mrb[0].mxu0
  %165 = vmatprep.mubr.f32.mxu0 0.0
  %166 = vmatmul.mubr.f32.gmra.mrb[0].mxu0 %v64
  %v167 = vpop.f32.mrb[0].mxu0
  %v168 = vadd.f32 %v45, %v167
  %v169 = vpop.f32.mrb[0].mxu0
  %170 = vmatprep.mubr.f32.mxu0 0.0
  %171 = vmatmul.mubr.f32.gmra.mrb[0].mxu0 %v67
  %v172 = vpop.f32.mrb[0].mxu0
  %v173 = vadd.f32 %v45, %v172
  %v174 = vpop.f32.mrb[0].mxu0
  %175 = vmatprep.mubr.f32.mxu0 0.0
  %176 = vmatmul.mubr.f32.gmra.mrb[0].mxu0 %v70
  %v177 = vpop.f32.mrb[0].mxu0
  %v178 = vadd.f32 %v45, %v177
  %v179 = vpop.f32.mrb[0].mxu0
  %180 = vdwg.mxu0
  %181 = vst [vmem:[#allocation2] sm:$0xff] %v143
  %182 = vst [vmem:[#allocation2 + $0x8] sm:$0xff] %v148
  %183 = vst [vmem:[#allocation2 + $0x10] sm:$0xff] %v153
  %184 = vst [vmem:[#allocation2 + $0x18] sm:$0xff] %v158
  %185 = vst [vmem:[#allocation2 + $0x20] sm:$0xff] %v163
  %186 = vst [vmem:[#allocation2 + $0x28] sm:$0xff] %v168
  %187 = vst [vmem:[#allocation2 + $0x30] sm:$0xff] %v173
  %188 = vst [vmem:[#allocation2 + $0x38] sm:$0xff] %v178
  %v189 = vld [vmem:[%s2] sm:$0xff]
  %v190 = vld [vmem:[%s2 + $0x8] sm:$0xff]
  %v191 = vld [vmem:[%s2 + $0x10] sm:$0xff]
  %v192 = vld [vmem:[%s2 + $0x18] sm:$0xff]
  %v193 = vld [vmem:[%s4] sm:$0xff]
  %v194 = vld [vmem:[%s4 + $0x8] sm:$0xff]
  %v195 = vld [vmem:[%s4 + $0x10] sm:$0xff]
  %v196 = vld [vmem:[%s4 + $0x18] sm:$0xff]
  %v197 = vld [vmem:[%s4 + $0x20] sm:$0xff]
  %v198 = vld [vmem:[%s4 + $0x28] sm:$0xff]
  %v199 = vld [vmem:[%s4 + $0x30] sm:$0xff]
  %v200 = vld [vmem:[%s4 + $0x38] sm:$0xff]
  %v201 = vld [vmem:[%s5] sm:$0x1]
  %v202 = vld [vmem:[#allocation2] sm:$0xff]
  %vm203 = vcmask 261120
  %v205 = vsel %vm203, 0.0, 0
  %207 = vmatprep.subr.mxu0 0.0
  %208 = vmatpush1.msra.mxu0 %v189
  %209 = vmatprep.subr.mxu0 0.0
  %210 = vmatpush1.msra.mxu0 %v190
  %211 = vmatprep.subr.mxu0 0.0
  %212 = vmatpush1.msra.mxu0 %v191
  %213 = vmatprep.subr.mxu0 0.0
  %214 = vmatpush1.msra.mxu0 %v192
  %215 = vmatprep.subr.mxu0 0.0
  %216 = vmatpush1.msra.mxu0 0.0
  %217 = vmatprep.subr.mxu0 0.0
  %218 = vmatpush1.msra.mxu0 0.0
  %219 = vmatprep.subr.mxu0 0.0
  %220 = vmatpush1.msra.mxu0 0.0
  %221 = vmatprep.subr.mxu0 0.0
  %222 = vmatpush1.msra.mxu0 0.0
  %223 = vmatprep.subr.mxu0 0.0
  %224 = vmatpush1.msra.mxu0 0.0
  %225 = vmatprep.subr.mxu0 0.0
  %226 = vmatpush1.msra.mxu0 0.0
  %227 = vmatprep.subr.mxu0 0.0
  %228 = vmatpush1.msra.mxu0 0.0
  %229 = vmatprep.subr.mxu0 0.0
  %230 = vmatpush1.msra.mxu0 0.0
  %231 = vmatprep.subr.mxu0 0.0
  %232 = vmatpush1.msra.mxu0 0.0
  %233 = vmatprep.subr.mxu0 0.0
  %234 = vmatpush1.msra.mxu0 0.0
  %235 = vmatprep.subr.mxu0 0.0
  %236 = vmatpush1.msra.mxu0 0.0
  %237 = vmatprep.subr.mxu0 0.0
  %238 = vmatpush1.msra.mxu0 0.0
  %239 = vmatprep.subr.mxu0 0.0
  %240 = vmatpush1.msra.mxu0 0.0
  %241 = vmatprep.subr.mxu0 0.0
  %242 = vmatpush1.msra.mxu0 0.0
  %243 = vmatprep.subr.mxu0 0.0
  %244 = vmatpush1.msra.mxu0 0.0
  %245 = vmatprep.subr.mxu0 0.0
  %246 = vmatpush1.msra.mxu0 0.0
  %247 = vmatprep.subr.mxu0 0.0
  %248 = vmatpush1.msra.mxu0 0.0
  %249 = vmatprep.subr.mxu0 0.0
  %250 = vmatpush1.msra.mxu0 0.0
  %251 = vmatprep.subr.mxu0 0.0
  %252 = vmatpush1.msra.mxu0 0.0
  %253 = vmatprep.subr.mxu0 0.0
  %254 = vmatpush1.msra.mxu0 0.0
  %255 = vmatprep.subr.mxu0 0.0
  %256 = vmatpush1.msra.mxu0 0.0
  %257 = vmatprep.subr.mxu0 0.0
  %258 = vmatpush1.msra.mxu0 0.0
  %259 = vmatprep.subr.mxu0 0.0
  %260 = vmatpush1.msra.mxu0 0.0
  %261 = vmatprep.subr.mxu0 0.0
  %262 = vmatpush1.msra.mxu0 0.0
  %263 = vmatprep.subr.mxu0 0.0
  %264 = vmatpush1.msra.mxu0 0.0
  %265 = vmatprep.subr.mxu0 0.0
  %266 = vmatpush1.msra.mxu0 0.0
  %267 = vmatprep.subr.mxu0 0.0
  %268 = vmatpush1.msra.mxu0 0.0
  %269 = vmatprep.subr.mxu0 0.0
  %270 = vmatpush1.msra.mxu0 0.0
  %271 = vmatprep.mubr.f32.mxu0 0.0
  %272 = vmatmul.mubr.f32.gmra.mrb[0].mxu0 %v205
  %v273 = vpop.f32.mrb[0].mxu0
  %v274 = vadd.f32 0.0, %v273
  %v275 = vpop.f32.mrb[0].mxu0
  %276 = vdwg.mxu0
  %v277 = vadd.f32 %v202, %v274
  %v278 = vxor.u32 %v277, 2147483648
  %v279 = vmul.f32 %v278, 1.442695
  %v280 = vpow.pop %v279
  %v281 = vadd.f32 %v280, 1.0
  %v282 = vrcp.pop %v281
  %v283 = vmul.f32 1.0, %v282
  %v284 = vtanh.pop %v277
  %v285 = vmul.f32 %v283, 0.0
  %287 = vrot.lane.b32.xlu0 %v284, 64
  %v288 = vpop.permute.xlu0 %287
  %v290 = vmul.f32 %v283, %v288
  %292 = vrot.lane.b32.xlu0 %v290, 32
  %v293 = vpop.permute.xlu0 %292
  %v295 = vadd.f32 %v285, %v293
  %v296 = vtanh.pop %v295
  %298 = vrot.lane.b32.xlu0 %v296, 64
  %v299 = vpop.permute.xlu0 %298
  %v301 = vmul.f32 %v283, %v299
  %303 = vrot.lane.b32.xlu0 %v301, 32
  %v304 = vpop.permute.xlu0 %303
  %v306 = vsel %vm203, %v304, 0.0
  %v308 = vlaneseq
  %v309 = vshrl.u32 %v308, 7
  %v310 = vsub.s32 0, %v309
  %v311 = vrot.slane %v201, %v310
  %vm313 = vcmask 523264
  %v315 = vsel %vm313, %v306, 0
  %317 = vmatprep.subr.mxu0 0.0
  %318 = vmatpush1.msra.mxu0 %v193
  %319 = vmatprep.subr.mxu0 0.0
  %320 = vmatpush1.msra.mxu0 %v194
  %321 = vmatprep.subr.mxu0 0.0
  %322 = vmatpush1.msra.mxu0 %v195
  %323 = vmatprep.subr.mxu0 0.0
  %324 = vmatpush1.msra.mxu0 %v196
  %325 = vmatprep.subr.mxu0 0.0
  %326 = vmatpush1.msra.mxu0 %v197
  %327 = vmatprep.subr.mxu0 0.0
  %328 = vmatpush1.msra.mxu0 %v198
  %329 = vmatprep.subr.mxu0 0.0
  %330 = vmatpush1.msra.mxu0 %v199
  %331 = vmatprep.subr.mxu0 0.0
  %332 = vmatpush1.msra.mxu0 %v200
  %333 = vmatprep.subr.mxu0 0.0
  %334 = vmatpush1.msra.mxu0 0.0
  %335 = vmatprep.subr.mxu0 0.0
  %336 = vmatpush1.msra.mxu0 0.0
  %337 = vmatprep.subr.mxu0 0.0
  %338 = vmatpush1.msra.mxu0 0.0
  %339 = vmatprep.subr.mxu0 0.0
  %340 = vmatpush1.msra.mxu0 0.0
  %341 = vmatprep.subr.mxu0 0.0
  %342 = vmatpush1.msra.mxu0 0.0
  %343 = vmatprep.subr.mxu0 0.0
  %344 = vmatpush1.msra.mxu0 0.0
  %345 = vmatprep.subr.mxu0 0.0
  %346 = vmatpush1.msra.mxu0 0.0
  %347 = vmatprep.subr.mxu0 0.0
  %348 = vmatpush1.msra.mxu0 0.0
  %349 = vmatprep.subr.mxu0 0.0
  %350 = vmatpush1.msra.mxu0 0.0
  %351 = vmatprep.subr.mxu0 0.0
  %352 = vmatpush1.msra.mxu0 0.0
  %353 = vmatprep.subr.mxu0 0.0
  %354 = vmatpush1.msra.mxu0 0.0
  %355 = vmatprep.subr.mxu0 0.0
  %356 = vmatpush1.msra.mxu0 0.0
  %357 = vmatprep.subr.mxu0 0.0
  %358 = vmatpush1.msra.mxu0 0.0
  %359 = vmatprep.subr.mxu0 0.0
  %360 = vmatpush1.msra.mxu0 0.0
  %361 = vmatprep.subr.mxu0 0.0
  %362 = vmatpush1.msra.mxu0 0.0
  %363 = vmatprep.subr.mxu0 0.0
  %364 = vmatpush1.msra.mxu0 0.0
  %365 = vmatprep.subr.mxu0 0.0
  %366 = vmatpush1.msra.mxu0 0.0
  %367 = vmatprep.subr.mxu0 0.0
  %368 = vmatpush1.msra.mxu0 0.0
  %369 = vmatprep.subr.mxu0 0.0
  %370 = vmatpush1.msra.mxu0 0.0
  %371 = vmatprep.subr.mxu0 0.0
  %372 = vmatpush1.msra.mxu0 0.0
  %373 = vmatprep.subr.mxu0 0.0
  %374 = vmatpush1.msra.mxu0 0.0
  %375 = vmatprep.subr.mxu0 0.0
  %376 = vmatpush1.msra.mxu0 0.0
  %377 = vmatprep.subr.mxu0 0.0
  %378 = vmatpush1.msra.mxu0 0.0
  %379 = vmatprep.subr.mxu0 0.0
  %380 = vmatpush1.msra.mxu0 0.0
  %381 = vmatprep.mubr.f32.mxu0 0.0
  %382 = vmatmul.mubr.f32.gmra.mrb[0].mxu0 %v315
  %v383 = vpop.f32.mrb[0].mxu0
  %v384 = vadd.f32 %v311, %v383
  %v385 = vpop.f32.mrb[0].mxu0
  %386 = vdwg.mxu0
  %v387 = vxor.u32 %v384, 2147483648
  %v388 = vmul.f32 %v387, 1.442695
  %v389 = vpow.pop %v388
  %v390 = vadd.f32 %v389, 1.0
  %v391 = vrcp.pop %v390
  %v392 = vmul.f32 1.0, %v391
  %v393 = vtanh.pop %v384
  %v394 = vmul.f32 %v392, 0.0
  %396 = vrot.lane.b32.xlu0 %v393, 64
  %v397 = vpop.permute.xlu0 %396
  %v399 = vmul.f32 %v392, %v397
  %401 = vrot.lane.b32.xlu0 %v399, 32
  %v402 = vpop.permute.xlu0 %401
  %v404 = vadd.f32 %v394, %v402
  %v405 = vtanh.pop %v404
  %407 = vrot.lane.b32.xlu0 %v405, 64
  %v408 = vpop.permute.xlu0 %407
  %v410 = vmul.f32 %v392, %v408
  %s411 = scalar_lea.vmem [#allocation2], 8
  %v412 = vld [vmem:[%s411] sm:$0xff]
  %v413 = vsel %vm203, %v304, 0
  %415 = vmatprep.subr.mxu0 0.0
  %416 = vmatpush1.msra.mxu0 %v189
  %417 = vmatprep.subr.mxu0 0.0
  %418 = vmatpush1.msra.mxu0 %v190
  %419 = vmatprep.subr.mxu0 0.0
  %420 = vmatpush1.msra.mxu0 %v191
  %421 = vmatprep.subr.mxu0 0.0
  %422 = vmatpush1.msra.mxu0 %v192
  %423 = vmatprep.subr.mxu0 0.0
  %424 = vmatpush1.msra.mxu0 0.0
  %425 = vmatprep.subr.mxu0 0.0
  %426 = vmatpush1.msra.mxu0 0.0
  %427 = vmatprep.subr.mxu0 0.0
  %428 = vmatpush1.msra.mxu0 0.0
  %429 = vmatprep.subr.mxu0 0.0
  %430 = vmatpush1.msra.mxu0 0.0
  %431 = vmatprep.subr.mxu0 0.0
  %432 = vmatpush1.msra.mxu0 0.0
  %433 = vmatprep.subr.mxu0 0.0
  %434 = vmatpush1.msra.mxu0 0.0
  %435 = vmatprep.subr.mxu0 0.0
  %436 = vmatpush1.msra.mxu0 0.0
  %437 = vmatprep.subr.mxu0 0.0
  %438 = vmatpush1.msra.mxu0 0.0
  %439 = vmatprep.subr.mxu0 0.0
  %440 = vmatpush1.msra.mxu0 0.0
  %441 = vmatprep.subr.mxu0 0.0
  %442 = vmatpush1.msra.mxu0 0.0
  %443 = vmatprep.subr.mxu0 0.0
  %444 = vmatpush1.msra.mxu0 0.0
  %445 = vmatprep.subr.mxu0 0.0
  %446 = vmatpush1.msra.mxu0 0.0
  %447 = vmatprep.subr.mxu0 0.0
  %448 = vmatpush1.msra.mxu0 0.0
  %449 = vmatprep.subr.mxu0 0.0
  %450 = vmatpush1.msra.mxu0 0.0
  %451 = vmatprep.subr.mxu0 0.0
  %452 = vmatpush1.msra.mxu0 0.0
  %453 = vmatprep.subr.mxu0 0.0
  %454 = vmatpush1.msra.mxu0 0.0
  %455 = vmatprep.subr.mxu0 0.0
  %456 = vmatpush1.msra.mxu0 0.0
  %457 = vmatprep.subr.mxu0 0.0
  %458 = vmatpush1.msra.mxu0 0.0
  %459 = vmatprep.subr.mxu0 0.0
  %460 = vmatpush1.msra.mxu0 0.0
  %461 = vmatprep.subr.mxu0 0.0
  %462 = vmatpush1.msra.mxu0 0.0
  %463 = vmatprep.subr.mxu0 0.0
  %464 = vmatpush1.msra.mxu0 0.0
  %465 = vmatprep.subr.mxu0 0.0
  %466 = vmatpush1.msra.mxu0 0.0
  %467 = vmatprep.subr.mxu0 0.0
  %468 = vmatpush1.msra.mxu0 0.0
  %469 = vmatprep.subr.mxu0 0.0
  %470 = vmatpush1.msra.mxu0 0.0
  %471 = vmatprep.subr.mxu0 0.0
  %472 = vmatpush1.msra.mxu0 0.0
  %473 = vmatprep.subr.mxu0 0.0
  %474 = vmatpush1.msra.mxu0 0.0
  %475 = vmatprep.subr.mxu0 0.0
  %476 = vmatpush1.msra.mxu0 0.0
  %477 = vmatprep.subr.mxu0 0.0
  %478 = vmatpush1.msra.mxu0 0.0
  %479 = vmatprep.mubr.f32.mxu0 0.0
  %480 = vmatmul.mubr.f32.gmra.mrb[0].mxu0 %v413
  %v481 = vpop.f32.mrb[0].mxu0
  %v482 = vadd.f32 0.0, %v481
  %v483 = vpop.f32.mrb[0].mxu0
  %484 = vdwg.mxu0
  %v485 = vadd.f32 %v412, %v482
  %v486 = vxor.u32 %v485, 2147483648
  %v487 = vmul.f32 %v486, 1.442695
  %v488 = vpow.pop %v487
  %v489 = vadd.f32 %v488, 1.0
  %v490 = vrcp.pop %v489
  %v491 = vmul.f32 1.0, %v490
  %v492 = vtanh.pop %v485
  %v493 = vmul.f32 %v491, %v295
  %495 = vrot.lane.b32.xlu0 %v492, 64
  %v496 = vpop.permute.xlu0 %495
  %v498 = vmul.f32 %v491, %v496
  %500 = vrot.lane.b32.xlu0 %v498, 32
  %v501 = vpop.permute.xlu0 %500
  %v503 = vadd.f32 %v493, %v501
  %v504 = vtanh.pop %v503
  %506 = vrot.lane.b32.xlu0 %v504, 64
  %v507 = vpop.permute.xlu0 %506
  %v509 = vmul.f32 %v491, %v507
  %511 = vrot.lane.b32.xlu0 %v509, 32
  %v512 = vpop.permute.xlu0 %511
  %515 = vrot.lane.b32.xlu0 %v410, 64
  %v516 = vpop.permute.xlu0 %515
  %v518 = vsel %vm203, %v512, %v516
  %v520 = vsel %vm313, %v518, 0
  %522 = vmatprep.subr.mxu0 0.0
  %523 = vmatpush1.msra.mxu0 %v193
  %524 = vmatprep.subr.mxu0 0.0
  %525 = vmatpush1.msra.mxu0 %v194
  %526 = vmatprep.subr.mxu0 0.0
  %527 = vmatpush1.msra.mxu0 %v195
  %528 = vmatprep.subr.mxu0 0.0
  %529 = vmatpush1.msra.mxu0 %v196
  %530 = vmatprep.subr.mxu0 0.0
  %531 = vmatpush1.msra.mxu0 %v197
  %532 = vmatprep.subr.mxu0 0.0
  %533 = vmatpush1.msra.mxu0 %v198
  %534 = vmatprep.subr.mxu0 0.0
  %535 = vmatpush1.msra.mxu0 %v199
  %536 = vmatprep.subr.mxu0 0.0
  %537 = vmatpush1.msra.mxu0 %v200
  %538 = vmatprep.subr.mxu0 0.0
  %539 = vmatpush1.msra.mxu0 0.0
  %540 = vmatprep.subr.mxu0 0.0
  %541 = vmatpush1.msra.mxu0 0.0
  %542 = vmatprep.subr.mxu0 0.0
  %543 = vmatpush1.msra.mxu0 0.0
  %544 = vmatprep.subr.mxu0 0.0
  %545 = vmatpush1.msra.mxu0 0.0
  %546 = vmatprep.subr.mxu0 0.0
  %547 = vmatpush1.msra.mxu0 0.0
  %548 = vmatprep.subr.mxu0 0.0
  %549 = vmatpush1.msra.mxu0 0.0
  %550 = vmatprep.subr.mxu0 0.0
  %551 = vmatpush1.msra.mxu0 0.0
  %552 = vmatprep.subr.mxu0 0.0
  %553 = vmatpush1.msra.mxu0 0.0
  %554 = vmatprep.subr.mxu0 0.0
  %555 = vmatpush1.msra.mxu0 0.0
  %556 = vmatprep.subr.mxu0 0.0
  %557 = vmatpush1.msra.mxu0 0.0
  %558 = vmatprep.subr.mxu0 0.0
  %559 = vmatpush1.msra.mxu0 0.0
  %560 = vmatprep.subr.mxu0 0.0
  %561 = vmatpush1.msra.mxu0 0.0
  %562 = vmatprep.subr.mxu0 0.0
  %563 = vmatpush1.msra.mxu0 0.0
  %564 = vmatprep.subr.mxu0 0.0
  %565 = vmatpush1.msra.mxu0 0.0
  %566 = vmatprep.subr.mxu0 0.0
  %567 = vmatpush1.msra.mxu0 0.0
  %568 = vmatprep.subr.mxu0 0.0
  %569 = vmatpush1.msra.mxu0 0.0
  %570 = vmatprep.subr.mxu0 0.0
  %571 = vmatpush1.msra.mxu0 0.0
  %572 = vmatprep.subr.mxu0 0.0
  %573 = vmatpush1.msra.mxu0 0.0
  %574 = vmatprep.subr.mxu0 0.0
  %575 = vmatpush1.msra.mxu0 0.0
  %576 = vmatprep.subr.mxu0 0.0
  %577 = vmatpush1.msra.mxu0 0.0
  %578 = vmatprep.subr.mxu0 0.0
  %579 = vmatpush1.msra.mxu0 0.0
  %580 = vmatprep.subr.mxu0 0.0
  %581 = vmatpush1.msra.mxu0 0.0
  %582 = vmatprep.subr.mxu0 0.0
  %583 = vmatpush1.msra.mxu0 0.0
  %584 = vmatprep.subr.mxu0 0.0
  %585 = vmatpush1.msra.mxu0 0.0
  %586 = vmatprep.mubr.f32.mxu0 0.0
  %587 = vmatmul.mubr.f32.gmra.mrb[0].mxu0 %v520
  %v588 = vpop.f32.mrb[0].mxu0
  %v589 = vadd.f32 %v311, %v588
  %v590 = vpop.f32.mrb[0].mxu0
  %591 = vdwg.mxu0
  %v592 = vxor.u32 %v589, 2147483648
  %v593 = vmul.f32 %v592, 1.442695
  %v594 = vpow.pop %v593
  %v595 = vadd.f32 %v594, 1.0
  %v596 = vrcp.pop %v595
  %v597 = vmul.f32 1.0, %v596
  %v598 = vtanh.pop %v589
  %v599 = vmul.f32 %v597, %v404
  %601 = vrot.lane.b32.xlu0 %v598, 64
  %v602 = vpop.permute.xlu0 %601
  %v604 = vmul.f32 %v597, %v602
  %606 = vrot.lane.b32.xlu0 %v604, 32
  %v607 = vpop.permute.xlu0 %606
  %v609 = vadd.f32 %v599, %v607
  %v610 = vtanh.pop %v609
  %612 = vrot.lane.b32.xlu0 %v610, 64
  %v613 = vpop.permute.xlu0 %612
  %v615 = vmul.f32 %v597, %v613
  %s616 = scalar_lea.vmem [#allocation2], 16
  %v617 = vld [vmem:[%s616] sm:$0xff]
  %v618 = vsel %vm203, %v512, 0
  %620 = vmatprep.subr.mxu0 0.0
  %621 = vmatpush1.msra.mxu0 %v189
  %622 = vmatprep.subr.mxu0 0.0
  %623 = vmatpush1.msra.mxu0 %v190
  %624 = vmatprep.subr.mxu0 0.0
  %625 = vmatpush1.msra.mxu0 %v191
  %626 = vmatprep.subr.mxu0 0.0
  %627 = vmatpush1.msra.mxu0 %v192
  %628 = vmatprep.subr.mxu0 0.0
  %629 = vmatpush1.msra.mxu0 0.0
  %630 = vmatprep.subr.mxu0 0.0
  %631 = vmatpush1.msra.mxu0 0.0
  %632 = vmatprep.subr.mxu0 0.0
  %633 = vmatpush1.msra.mxu0 0.0
  %634 = vmatprep.subr.mxu0 0.0
  %635 = vmatpush1.msra.mxu0 0.0
  %636 = vmatprep.subr.mxu0 0.0
  %637 = vmatpush1.msra.mxu0 0.0
  %638 = vmatprep.subr.mxu0 0.0
  %639 = vmatpush1.msra.mxu0 0.0
  %640 = vmatprep.subr.mxu0 0.0
  %641 = vmatpush1.msra.mxu0 0.0
  %642 = vmatprep.subr.mxu0 0.0
  %643 = vmatpush1.msra.mxu0 0.0
  %644 = vmatprep.subr.mxu0 0.0
  %645 = vmatpush1.msra.mxu0 0.0
  %646 = vmatprep.subr.mxu0 0.0
  %647 = vmatpush1.msra.mxu0 0.0
  %648 = vmatprep.subr.mxu0 0.0
  %649 = vmatpush1.msra.mxu0 0.0
  %650 = vmatprep.subr.mxu0 0.0
  %651 = vmatpush1.msra.mxu0 0.0
  %652 = vmatprep.subr.mxu0 0.0
  %653 = vmatpush1.msra.mxu0 0.0
  %654 = vmatprep.subr.mxu0 0.0
  %655 = vmatpush1.msra.mxu0 0.0
  %656 = vmatprep.subr.mxu0 0.0
  %657 = vmatpush1.msra.mxu0 0.0
  %658 = vmatprep.subr.mxu0 0.0
  %659 = vmatpush1.msra.mxu0 0.0
  %660 = vmatprep.subr.mxu0 0.0
  %661 = vmatpush1.msra.mxu0 0.0
  %662 = vmatprep.subr.mxu0 0.0
  %663 = vmatpush1.msra.mxu0 0.0
  %664 = vmatprep.subr.mxu0 0.0
  %665 = vmatpush1.msra.mxu0 0.0
  %666 = vmatprep.subr.mxu0 0.0
  %667 = vmatpush1.msra.mxu0 0.0
  %668 = vmatprep.subr.mxu0 0.0
  %669 = vmatpush1.msra.mxu0 0.0
  %670 = vmatprep.subr.mxu0 0.0
  %671 = vmatpush1.msra.mxu0 0.0
  %672 = vmatprep.subr.mxu0 0.0
  %673 = vmatpush1.msra.mxu0 0.0
  %674 = vmatprep.subr.mxu0 0.0
  %675 = vmatpush1.msra.mxu0 0.0
  %676 = vmatprep.subr.mxu0 0.0
  %677 = vmatpush1.msra.mxu0 0.0
  %678 = vmatprep.subr.mxu0 0.0
  %679 = vmatpush1.msra.mxu0 0.0
  %680 = vmatprep.subr.mxu0 0.0
  %681 = vmatpush1.msra.mxu0 0.0
  %682 = vmatprep.subr.mxu0 0.0
  %683 = vmatpush1.msra.mxu0 0.0
  %684 = vmatprep.mubr.f32.mxu0 0.0
  %685 = vmatmul.mubr.f32.gmra.mrb[0].mxu0 %v618
  %v686 = vpop.f32.mrb[0].mxu0
  %v687 = vadd.f32 0.0, %v686
  %v688 = vpop.f32.mrb[0].mxu0
  %689 = vdwg.mxu0
  %v690 = vadd.f32 %v617, %v687
  %v691 = vxor.u32 %v690, 2147483648
  %v692 = vmul.f32 %v691, 1.442695
  %v693 = vpow.pop %v692
  %v694 = vadd.f32 %v693, 1.0
  %v695 = vrcp.pop %v694
  %v696 = vmul.f32 1.0, %v695
  %v697 = vtanh.pop %v690
  %v698 = vmul.f32 %v696, %v503
  %700 = vrot.lane.b32.xlu0 %v697, 64
  %v701 = vpop.permute.xlu0 %700
  %v703 = vmul.f32 %v696, %v701
  %705 = vrot.lane.b32.xlu0 %v703, 32
  %v706 = vpop.permute.xlu0 %705
  %v708 = vadd.f32 %v698, %v706
  %v709 = vtanh.pop %v708
  %711 = vrot.lane.b32.xlu0 %v709, 64
  %v712 = vpop.permute.xlu0 %711
  %v714 = vmul.f32 %v696, %v712
  %716 = vrot.lane.b32.xlu0 %v714, 32
  %v717 = vpop.permute.xlu0 %716
  %720 = vrot.lane.b32.xlu0 %v615, 64
  %v721 = vpop.permute.xlu0 %720
  %v723 = vsel %vm203, %v717, %v721
  %v725 = vsel %vm313, %v723, 0
  %727 = vmatprep.subr.mxu0 0.0
  %728 = vmatpush1.msra.mxu0 %v193
  %729 = vmatprep.subr.mxu0 0.0
  %730 = vmatpush1.msra.mxu0 %v194
  %731 = vmatprep.subr.mxu0 0.0
  %732 = vmatpush1.msra.mxu0 %v195
  %733 = vmatprep.subr.mxu0 0.0
  %734 = vmatpush1.msra.mxu0 %v196
  %735 = vmatprep.subr.mxu0 0.0
  %736 = vmatpush1.msra.mxu0 %v197
  %737 = vmatprep.subr.mxu0 0.0
  %738 = vmatpush1.msra.mxu0 %v198
  %739 = vmatprep.subr.mxu0 0.0
  %740 = vmatpush1.msra.mxu0 %v199
  %741 = vmatprep.subr.mxu0 0.0
  %742 = vmatpush1.msra.mxu0 %v200
  %743 = vmatprep.subr.mxu0 0.0
  %744 = vmatpush1.msra.mxu0 0.0
  %745 = vmatprep.subr.mxu0 0.0
  %746 = vmatpush1.msra.mxu0 0.0
  %747 = vmatprep.subr.mxu0 0.0
  %748 = vmatpush1.msra.mxu0 0.0
  %749 = vmatprep.subr.mxu0 0.0
  %750 = vmatpush1.msra.mxu0 0.0
  %751 = vmatprep.subr.mxu0 0.0
  %752 = vmatpush1.msra.mxu0 0.0
  %753 = vmatprep.subr.mxu0 0.0
  %754 = vmatpush1.msra.mxu0 0.0
  %755 = vmatprep.subr.mxu0 0.0
  %756 = vmatpush1.msra.mxu0 0.0
  %757 = vmatprep.subr.mxu0 0.0
  %758 = vmatpush1.msra.mxu0 0.0
  %759 = vmatprep.subr.mxu0 0.0
  %760 = vmatpush1.msra.mxu0 0.0
  %761 = vmatprep.subr.mxu0 0.0
  %762 = vmatpush1.msra.mxu0 0.0
  %763 = vmatprep.subr.mxu0 0.0
  %764 = vmatpush1.msra.mxu0 0.0
  %765 = vmatprep.subr.mxu0 0.0
  %766 = vmatpush1.msra.mxu0 0.0
  %767 = vmatprep.subr.mxu0 0.0
  %768 = vmatpush1.msra.mxu0 0.0
  %769 = vmatprep.subr.mxu0 0.0
  %770 = vmatpush1.msra.mxu0 0.0
  %771 = vmatprep.subr.mxu0 0.0
  %772 = vmatpush1.msra.mxu0 0.0
  %773 = vmatprep.subr.mxu0 0.0
  %774 = vmatpush1.msra.mxu0 0.0
  %775 = vmatprep.subr.mxu0 0.0
  %776 = vmatpush1.msra.mxu0 0.0
  %777 = vmatprep.subr.mxu0 0.0
  %778 = vmatpush1.msra.mxu0 0.0
  %779 = vmatprep.subr.mxu0 0.0
  %780 = vmatpush1.msra.mxu0 0.0
  %781 = vmatprep.subr.mxu0 0.0
  %782 = vmatpush1.msra.mxu0 0.0
  %783 = vmatprep.subr.mxu0 0.0
  %784 = vmatpush1.msra.mxu0 0.0
  %785 = vmatprep.subr.mxu0 0.0
  %786 = vmatpush1.msra.mxu0 0.0
  %787 = vmatprep.subr.mxu0 0.0
  %788 = vmatpush1.msra.mxu0 0.0
  %789 = vmatprep.subr.mxu0 0.0
  %790 = vmatpush1.msra.mxu0 0.0
  %791 = vmatprep.mubr.f32.mxu0 0.0
  %792 = vmatmul.mubr.f32.gmra.mrb[0].mxu0 %v725
  %v793 = vpop.f32.mrb[0].mxu0
  %v794 = vadd.f32 %v311, %v793
  %v795 = vpop.f32.mrb[0].mxu0
  %796 = vdwg.mxu0
  %v797 = vxor.u32 %v794, 2147483648
  %v798 = vmul.f32 %v797, 1.442695
  %v799 = vpow.pop %v798
  %v800 = vadd.f32 %v799, 1.0
  %v801 = vrcp.pop %v800
  %v802 = vmul.f32 1.0, %v801
  %v803 = vtanh.pop %v794
  %v804 = vmul.f32 %v802, %v609
  %806 = vrot.lane.b32.xlu0 %v803, 64
  %v807 = vpop.permute.xlu0 %806
  %v809 = vmul.f32 %v802, %v807
  %811 = vrot.lane.b32.xlu0 %v809, 32
  %v812 = vpop.permute.xlu0 %811
  %v814 = vadd.f32 %v804, %v812
  %v815 = vtanh.pop %v814
  %817 = vrot.lane.b32.xlu0 %v815, 64
  %v818 = vpop.permute.xlu0 %817
  %v820 = vmul.f32 %v802, %v818
  %s821 = scalar_lea.vmem [#allocation2], 24
  %v822 = vld [vmem:[%s821] sm:$0xff]
  %v823 = vsel %vm203, %v717, 0
  %825 = vmatprep.subr.mxu0 0.0
  %826 = vmatpush1.msra.mxu0 %v189
  %827 = vmatprep.subr.mxu0 0.0
  %828 = vmatpush1.msra.mxu0 %v190
  %829 = vmatprep.subr.mxu0 0.0
  %830 = vmatpush1.msra.mxu0 %v191
  %831 = vmatprep.subr.mxu0 0.0
  %832 = vmatpush1.msra.mxu0 %v192
  %833 = vmatprep.subr.mxu0 0.0
  %834 = vmatpush1.msra.mxu0 0.0
  %835 = vmatprep.subr.mxu0 0.0
  %836 = vmatpush1.msra.mxu0 0.0
  %837 = vmatprep.subr.mxu0 0.0
  %838 = vmatpush1.msra.mxu0 0.0
  %839 = vmatprep.subr.mxu0 0.0
  %840 = vmatpush1.msra.mxu0 0.0
  %841 = vmatprep.subr.mxu0 0.0
  %842 = vmatpush1.msra.mxu0 0.0
  %843 = vmatprep.subr.mxu0 0.0
  %844 = vmatpush1.msra.mxu0 0.0
  %845 = vmatprep.subr.mxu0 0.0
  %846 = vmatpush1.msra.mxu0 0.0
  %847 = vmatprep.subr.mxu0 0.0
  %848 = vmatpush1.msra.mxu0 0.0
  %849 = vmatprep.subr.mxu0 0.0
  %850 = vmatpush1.msra.mxu0 0.0
  %851 = vmatprep.subr.mxu0 0.0
  %852 = vmatpush1.msra.mxu0 0.0
  %853 = vmatprep.subr.mxu0 0.0
  %854 = vmatpush1.msra.mxu0 0.0
  %855 = vmatprep.subr.mxu0 0.0
  %856 = vmatpush1.msra.mxu0 0.0
  %857 = vmatprep.subr.mxu0 0.0
  %858 = vmatpush1.msra.mxu0 0.0
  %859 = vmatprep.subr.mxu0 0.0
  %860 = vmatpush1.msra.mxu0 0.0
  %861 = vmatprep.subr.mxu0 0.0
  %862 = vmatpush1.msra.mxu0 0.0
  %863 = vmatprep.subr.mxu0 0.0
  %864 = vmatpush1.msra.mxu0 0.0
  %865 = vmatprep.subr.mxu0 0.0
  %866 = vmatpush1.msra.mxu0 0.0
  %867 = vmatprep.subr.mxu0 0.0
  %868 = vmatpush1.msra.mxu0 0.0
  %869 = vmatprep.subr.mxu0 0.0
  %870 = vmatpush1.msra.mxu0 0.0
  %871 = vmatprep.subr.mxu0 0.0
  %872 = vmatpush1.msra.mxu0 0.0
  %873 = vmatprep.subr.mxu0 0.0
  %874 = vmatpush1.msra.mxu0 0.0
  %875 = vmatprep.subr.mxu0 0.0
  %876 = vmatpush1.msra.mxu0 0.0
  %877 = vmatprep.subr.mxu0 0.0
  %878 = vmatpush1.msra.mxu0 0.0
  %879 = vmatprep.subr.mxu0 0.0
  %880 = vmatpush1.msra.mxu0 0.0
  %881 = vmatprep.subr.mxu0 0.0
  %882 = vmatpush1.msra.mxu0 0.0
  %883 = vmatprep.subr.mxu0 0.0
  %884 = vmatpush1.msra.mxu0 0.0
  %885 = vmatprep.subr.mxu0 0.0
  %886 = vmatpush1.msra.mxu0 0.0
  %887 = vmatprep.subr.mxu0 0.0
  %888 = vmatpush1.msra.mxu0 0.0
  %889 = vmatprep.mubr.f32.mxu0 0.0
  %890 = vmatmul.mubr.f32.gmra.mrb[0].mxu0 %v823
  %v891 = vpop.f32.mrb[0].mxu0
  %v892 = vadd.f32 0.0, %v891
  %v893 = vpop.f32.mrb[0].mxu0
  %894 = vdwg.mxu0
  %v895 = vadd.f32 %v822, %v892
  %v896 = vxor.u32 %v895, 2147483648
  %v897 = vmul.f32 %v896, 1.442695
  %v898 = vpow.pop %v897
  %v899 = vadd.f32 %v898, 1.0
  %v900 = vrcp.pop %v899
  %v901 = vmul.f32 1.0, %v900
  %v902 = vtanh.pop %v895
  %v903 = vmul.f32 %v901, %v708
  %905 = vrot.lane.b32.xlu0 %v902, 64
  %v906 = vpop.permute.xlu0 %905
  %v908 = vmul.f32 %v901, %v906
  %910 = vrot.lane.b32.xlu0 %v908, 32
  %v911 = vpop.permute.xlu0 %910
  %v913 = vadd.f32 %v903, %v911
  %v914 = vtanh.pop %v913
  %916 = vrot.lane.b32.xlu0 %v914, 64
  %v917 = vpop.permute.xlu0 %916
  %v919 = vmul.f32 %v901, %v917
  %921 = vrot.lane.b32.xlu0 %v919, 32
  %v922 = vpop.permute.xlu0 %921
  %925 = vrot.lane.b32.xlu0 %v820, 64
  %v926 = vpop.permute.xlu0 %925
  %v928 = vsel %vm203, %v922, %v926
  %v930 = vsel %vm313, %v928, 0
  %932 = vmatprep.subr.mxu0 0.0
  %933 = vmatpush1.msra.mxu0 %v193
  %934 = vmatprep.subr.mxu0 0.0
  %935 = vmatpush1.msra.mxu0 %v194
  %936 = vmatprep.subr.mxu0 0.0
  %937 = vmatpush1.msra.mxu0 %v195
  %938 = vmatprep.subr.mxu0 0.0
  %939 = vmatpush1.msra.mxu0 %v196
  %940 = vmatprep.subr.mxu0 0.0
  %941 = vmatpush1.msra.mxu0 %v197
  %942 = vmatprep.subr.mxu0 0.0
  %943 = vmatpush1.msra.mxu0 %v198
  %944 = vmatprep.subr.mxu0 0.0
  %945 = vmatpush1.msra.mxu0 %v199
  %946 = vmatprep.subr.mxu0 0.0
  %947 = vmatpush1.msra.mxu0 %v200
  %948 = vmatprep.subr.mxu0 0.0
  %949 = vmatpush1.msra.mxu0 0.0
  %950 = vmatprep.subr.mxu0 0.0
  %951 = vmatpush1.msra.mxu0 0.0
  %952 = vmatprep.subr.mxu0 0.0
  %953 = vmatpush1.msra.mxu0 0.0
  %954 = vmatprep.subr.mxu0 0.0
  %955 = vmatpush1.msra.mxu0 0.0
  %956 = vmatprep.subr.mxu0 0.0
  %957 = vmatpush1.msra.mxu0 0.0
  %958 = vmatprep.subr.mxu0 0.0
  %959 = vmatpush1.msra.mxu0 0.0
  %960 = vmatprep.subr.mxu0 0.0
  %961 = vmatpush1.msra.mxu0 0.0
  %962 = vmatprep.subr.mxu0 0.0
  %963 = vmatpush1.msra.mxu0 0.0
  %964 = vmatprep.subr.mxu0 0.0
  %965 = vmatpush1.msra.mxu0 0.0
  %966 = vmatprep.subr.mxu0 0.0
  %967 = vmatpush1.msra.mxu0 0.0
  %968 = vmatprep.subr.mxu0 0.0
  %969 = vmatpush1.msra.mxu0 0.0
  %970 = vmatprep.subr.mxu0 0.0
  %971 = vmatpush1.msra.mxu0 0.0
  %972 = vmatprep.subr.mxu0 0.0
  %973 = vmatpush1.msra.mxu0 0.0
  %974 = vmatprep.subr.mxu0 0.0
  %975 = vmatpush1.msra.mxu0 0.0
  %976 = vmatprep.subr.mxu0 0.0
  %977 = vmatpush1.msra.mxu0 0.0
  %978 = vmatprep.subr.mxu0 0.0
  %979 = vmatpush1.msra.mxu0 0.0
  %980 = vmatprep.subr.mxu0 0.0
  %981 = vmatpush1.msra.mxu0 0.0
  %982 = vmatprep.subr.mxu0 0.0
  %983 = vmatpush1.msra.mxu0 0.0
  %984 = vmatprep.subr.mxu0 0.0
  %985 = vmatpush1.msra.mxu0 0.0
  %986 = vmatprep.subr.mxu0 0.0
  %987 = vmatpush1.msra.mxu0 0.0
  %988 = vmatprep.subr.mxu0 0.0
  %989 = vmatpush1.msra.mxu0 0.0
  %990 = vmatprep.subr.mxu0 0.0
  %991 = vmatpush1.msra.mxu0 0.0
  %992 = vmatprep.subr.mxu0 0.0
  %993 = vmatpush1.msra.mxu0 0.0
  %994 = vmatprep.subr.mxu0 0.0
  %995 = vmatpush1.msra.mxu0 0.0
  %996 = vmatprep.mubr.f32.mxu0 0.0
  %997 = vmatmul.mubr.f32.gmra.mrb[0].mxu0 %v930
  %v998 = vpop.f32.mrb[0].mxu0
  %v999 = vadd.f32 %v311, %v998
  %v1000 = vpop.f32.mrb[0].mxu0
  %1001 = vdwg.mxu0
  %v1002 = vxor.u32 %v999, 2147483648
  %v1003 = vmul.f32 %v1002, 1.442695
  %v1004 = vpow.pop %v1003
  %v1005 = vadd.f32 %v1004, 1.0
  %v1006 = vrcp.pop %v1005
  %v1007 = vmul.f32 1.0, %v1006
  %v1008 = vtanh.pop %v999
  %v1009 = vmul.f32 %v1007, %v814
  %1011 = vrot.lane.b32.xlu0 %v1008, 64
  %v1012 = vpop.permute.xlu0 %1011
  %v1014 = vmul.f32 %v1007, %v1012
  %1016 = vrot.lane.b32.xlu0 %v1014, 32
  %v1017 = vpop.permute.xlu0 %1016
  %v1019 = vadd.f32 %v1009, %v1017
  %v1020 = vtanh.pop %v1019
  %1022 = vrot.lane.b32.xlu0 %v1020, 64
  %v1023 = vpop.permute.xlu0 %1022
  %v1025 = vmul.f32 %v1007, %v1023
  %s1026 = scalar_lea.vmem [#allocation2], 32
  %v1027 = vld [vmem:[%s1026] sm:$0xff]
  %v1028 = vsel %vm203, %v922, 0
  %1030 = vmatprep.subr.mxu0 0.0
  %1031 = vmatpush1.msra.mxu0 %v189
  %1032 = vmatprep.subr.mxu0 0.0
  %1033 = vmatpush1.msra.mxu0 %v190
  %1034 = vmatprep.subr.mxu0 0.0
  %1035 = vmatpush1.msra.mxu0 %v191
  %1036 = vmatprep.subr.mxu0 0.0
  %1037 = vmatpush1.msra.mxu0 %v192
  %1038 = vmatprep.subr.mxu0 0.0
  %1039 = vmatpush1.msra.mxu0 0.0
  %1040 = vmatprep.subr.mxu0 0.0
  %1041 = vmatpush1.msra.mxu0 0.0
  %1042 = vmatprep.subr.mxu0 0.0
  %1043 = vmatpush1.msra.mxu0 0.0
  %1044 = vmatprep.subr.mxu0 0.0
  %1045 = vmatpush1.msra.mxu0 0.0
  %1046 = vmatprep.subr.mxu0 0.0
  %1047 = vmatpush1.msra.mxu0 0.0
  %1048 = vmatprep.subr.mxu0 0.0
  %1049 = vmatpush1.msra.mxu0 0.0
  %1050 = vmatprep.subr.mxu0 0.0
  %1051 = vmatpush1.msra.mxu0 0.0
  %1052 = vmatprep.subr.mxu0 0.0
  %1053 = vmatpush1.msra.mxu0 0.0
  %1054 = vmatprep.subr.mxu0 0.0
  %1055 = vmatpush1.msra.mxu0 0.0
  %1056 = vmatprep.subr.mxu0 0.0
  %1057 = vmatpush1.msra.mxu0 0.0
  %1058 = vmatprep.subr.mxu0 0.0
  %1059 = vmatpush1.msra.mxu0 0.0
  %1060 = vmatprep.subr.mxu0 0.0
  %1061 = vmatpush1.msra.mxu0 0.0
  %1062 = vmatprep.subr.mxu0 0.0
  %1063 = vmatpush1.msra.mxu0 0.0
  %1064 = vmatprep.subr.mxu0 0.0
  %1065 = vmatpush1.msra.mxu0 0.0
  %1066 = vmatprep.subr.mxu0 0.0
  %1067 = vmatpush1.msra.mxu0 0.0
  %1068 = vmatprep.subr.mxu0 0.0
  %1069 = vmatpush1.msra.mxu0 0.0
  %1070 = vmatprep.subr.mxu0 0.0
  %1071 = vmatpush1.msra.mxu0 0.0
  %1072 = vmatprep.subr.mxu0 0.0
  %1073 = vmatpush1.msra.mxu0 0.0
  %1074 = vmatprep.subr.mxu0 0.0
  %1075 = vmatpush1.msra.mxu0 0.0
  %1076 = vmatprep.subr.mxu0 0.0
  %1077 = vmatpush1.msra.mxu0 0.0
  %1078 = vmatprep.subr.mxu0 0.0
  %1079 = vmatpush1.msra.mxu0 0.0
  %1080 = vmatprep.subr.mxu0 0.0
  %1081 = vmatpush1.msra.mxu0 0.0
  %1082 = vmatprep.subr.mxu0 0.0
  %1083 = vmatpush1.msra.mxu0 0.0
  %1084 = vmatprep.subr.mxu0 0.0
  %1085 = vmatpush1.msra.mxu0 0.0
  %1086 = vmatprep.subr.mxu0 0.0
  %1087 = vmatpush1.msra.mxu0 0.0
  %1088 = vmatprep.subr.mxu0 0.0
  %1089 = vmatpush1.msra.mxu0 0.0
  %1090 = vmatprep.subr.mxu0 0.0
  %1091 = vmatpush1.msra.mxu0 0.0
  %1092 = vmatprep.subr.mxu0 0.0
  %1093 = vmatpush1.msra.mxu0 0.0
  %1094 = vmatprep.mubr.f32.mxu0 0.0
  %1095 = vmatmul.mubr.f32.gmra.mrb[0].mxu0 %v1028
  %v1096 = vpop.f32.mrb[0].mxu0
  %v1097 = vadd.f32 0.0, %v1096
  %v1098 = vpop.f32.mrb[0].mxu0
  %1099 = vdwg.mxu0
  %v1100 = vadd.f32 %v1027, %v1097
  %v1101 = vxor.u32 %v1100, 2147483648
  %v1102 = vmul.f32 %v1101, 1.442695
  %v1103 = vpow.pop %v1102
  %v1104 = vadd.f32 %v1103, 1.0
  %v1105 = vrcp.pop %v1104
  %v1106 = vmul.f32 1.0, %v1105
  %v1107 = vtanh.pop %v1100
  %v1108 = vmul.f32 %v1106, %v913
  %1110 = vrot.lane.b32.xlu0 %v1107, 64
  %v1111 = vpop.permute.xlu0 %1110
  %v1113 = vmul.f32 %v1106, %v1111
  %1115 = vrot.lane.b32.xlu0 %v1113, 32
  %v1116 = vpop.permute.xlu0 %1115
  %v1118 = vadd.f32 %v1108, %v1116
  %v1119 = vtanh.pop %v1118
  %1121 = vrot.lane.b32.xlu0 %v1119, 64
  %v1122 = vpop.permute.xlu0 %1121
  %v1124 = vmul.f32 %v1106, %v1122
  %1126 = vrot.lane.b32.xlu0 %v1124, 32
  %v1127 = vpop.permute.xlu0 %1126
  %1130 = vrot.lane.b32.xlu0 %v1025, 64
  %v1131 = vpop.permute.xlu0 %1130
  %v1133 = vsel %vm203, %v1127, %v1131
  %v1135 = vsel %vm313, %v1133, 0
  %1137 = vmatprep.subr.mxu0 0.0
  %1138 = vmatpush1.msra.mxu0 %v193
  %1139 = vmatprep.subr.mxu0 0.0
  %1140 = vmatpush1.msra.mxu0 %v194
  %1141 = vmatprep.subr.mxu0 0.0
  %1142 = vmatpush1.msra.mxu0 %v195
  %1143 = vmatprep.subr.mxu0 0.0
  %1144 = vmatpush1.msra.mxu0 %v196
  %1145 = vmatprep.subr.mxu0 0.0
  %1146 = vmatpush1.msra.mxu0 %v197
  %1147 = vmatprep.subr.mxu0 0.0
  %1148 = vmatpush1.msra.mxu0 %v198
  %1149 = vmatprep.subr.mxu0 0.0
  %1150 = vmatpush1.msra.mxu0 %v199
  %1151 = vmatprep.subr.mxu0 0.0
  %1152 = vmatpush1.msra.mxu0 %v200
  %1153 = vmatprep.subr.mxu0 0.0
  %1154 = vmatpush1.msra.mxu0 0.0
  %1155 = vmatprep.subr.mxu0 0.0
  %1156 = vmatpush1.msra.mxu0 0.0
  %1157 = vmatprep.subr.mxu0 0.0
  %1158 = vmatpush1.msra.mxu0 0.0
  %1159 = vmatprep.subr.mxu0 0.0
  %1160 = vmatpush1.msra.mxu0 0.0
  %1161 = vmatprep.subr.mxu0 0.0
  %1162 = vmatpush1.msra.mxu0 0.0
  %1163 = vmatprep.subr.mxu0 0.0
  %1164 = vmatpush1.msra.mxu0 0.0
  %1165 = vmatprep.subr.mxu0 0.0
  %1166 = vmatpush1.msra.mxu0 0.0
  %1167 = vmatprep.subr.mxu0 0.0
  %1168 = vmatpush1.msra.mxu0 0.0
  %1169 = vmatprep.subr.mxu0 0.0
  %1170 = vmatpush1.msra.mxu0 0.0
  %1171 = vmatprep.subr.mxu0 0.0
  %1172 = vmatpush1.msra.mxu0 0.0
  %1173 = vmatprep.subr.mxu0 0.0
  %1174 = vmatpush1.msra.mxu0 0.0
  %1175 = vmatprep.subr.mxu0 0.0
  %1176 = vmatpush1.msra.mxu0 0.0
  %1177 = vmatprep.subr.mxu0 0.0
  %1178 = vmatpush1.msra.mxu0 0.0
  %1179 = vmatprep.subr.mxu0 0.0
  %1180 = vmatpush1.msra.mxu0 0.0
  %1181 = vmatprep.subr.mxu0 0.0
  %1182 = vmatpush1.msra.mxu0 0.0
  %1183 = vmatprep.subr.mxu0 0.0
  %1184 = vmatpush1.msra.mxu0 0.0
  %1185 = vmatprep.subr.mxu0 0.0
  %1186 = vmatpush1.msra.mxu0 0.0
  %1187 = vmatprep.subr.mxu0 0.0
  %1188 = vmatpush1.msra.mxu0 0.0
  %1189 = vmatprep.subr.mxu0 0.0
  %1190 = vmatpush1.msra.mxu0 0.0
  %1191 = vmatprep.subr.mxu0 0.0
  %1192 = vmatpush1.msra.mxu0 0.0
  %1193 = vmatprep.subr.mxu0 0.0
  %1194 = vmatpush1.msra.mxu0 0.0
  %1195 = vmatprep.subr.mxu0 0.0
  %1196 = vmatpush1.msra.mxu0 0.0
  %1197 = vmatprep.subr.mxu0 0.0
  %1198 = vmatpush1.msra.mxu0 0.0
  %1199 = vmatprep.subr.mxu0 0.0
  %1200 = vmatpush1.msra.mxu0 0.0
  %1201 = vmatprep.mubr.f32.mxu0 0.0
  %1202 = vmatmul.mubr.f32.gmra.mrb[0].mxu0 %v1135
  %v1203 = vpop.f32.mrb[0].mxu0
  %v1204 = vadd.f32 %v311, %v1203
  %v1205 = vpop.f32.mrb[0].mxu0
  %1206 = vdwg.mxu0
  %v1207 = vxor.u32 %v1204, 2147483648
  %v1208 = vmul.f32 %v1207, 1.442695
  %v1209 = vpow.pop %v1208
  %v1210 = vadd.f32 %v1209, 1.0
  %v1211 = vrcp.pop %v1210
  %v1212 = vmul.f32 1.0, %v1211
  %v1213 = vtanh.pop %v1204
  %v1214 = vmul.f32 %v1212, %v1019
  %1216 = vrot.lane.b32.xlu0 %v1213, 64
  %v1217 = vpop.permute.xlu0 %1216
  %v1219 = vmul.f32 %v1212, %v1217
  %1221 = vrot.lane.b32.xlu0 %v1219, 32
  %v1222 = vpop.permute.xlu0 %1221
  %v1224 = vadd.f32 %v1214, %v1222
  %v1225 = vtanh.pop %v1224
  %1227 = vrot.lane.b32.xlu0 %v1225, 64
  %v1228 = vpop.permute.xlu0 %1227
  %v1230 = vmul.f32 %v1212, %v1228
  %s1231 = scalar_lea.vmem [#allocation2], 40
  %v1232 = vld [vmem:[%s1231] sm:$0xff]
  %v1233 = vsel %vm203, %v1127, 0
  %1235 = vmatprep.subr.mxu0 0.0
  %1236 = vmatpush1.msra.mxu0 %v189
  %1237 = vmatprep.subr.mxu0 0.0
  %1238 = vmatpush1.msra.mxu0 %v190
  %1239 = vmatprep.subr.mxu0 0.0
  %1240 = vmatpush1.msra.mxu0 %v191
  %1241 = vmatprep.subr.mxu0 0.0
  %1242 = vmatpush1.msra.mxu0 %v192
  %1243 = vmatprep.subr.mxu0 0.0
  %1244 = vmatpush1.msra.mxu0 0.0
  %1245 = vmatprep.subr.mxu0 0.0
  %1246 = vmatpush1.msra.mxu0 0.0
  %1247 = vmatprep.subr.mxu0 0.0
  %1248 = vmatpush1.msra.mxu0 0.0
  %1249 = vmatprep.subr.mxu0 0.0
  %1250 = vmatpush1.msra.mxu0 0.0
  %1251 = vmatprep.subr.mxu0 0.0
  %1252 = vmatpush1.msra.mxu0 0.0
  %1253 = vmatprep.subr.mxu0 0.0
  %1254 = vmatpush1.msra.mxu0 0.0
  %1255 = vmatprep.subr.mxu0 0.0
  %1256 = vmatpush1.msra.mxu0 0.0
  %1257 = vmatprep.subr.mxu0 0.0
  %1258 = vmatpush1.msra.mxu0 0.0
  %1259 = vmatprep.subr.mxu0 0.0
  %1260 = vmatpush1.msra.mxu0 0.0
  %1261 = vmatprep.subr.mxu0 0.0
  %1262 = vmatpush1.msra.mxu0 0.0
  %1263 = vmatprep.subr.mxu0 0.0
  %1264 = vmatpush1.msra.mxu0 0.0
  %1265 = vmatprep.subr.mxu0 0.0
  %1266 = vmatpush1.msra.mxu0 0.0
  %1267 = vmatprep.subr.mxu0 0.0
  %1268 = vmatpush1.msra.mxu0 0.0
  %1269 = vmatprep.subr.mxu0 0.0
  %1270 = vmatpush1.msra.mxu0 0.0
  %1271 = vmatprep.subr.mxu0 0.0
  %1272 = vmatpush1.msra.mxu0 0.0
  %1273 = vmatprep.subr.mxu0 0.0
  %1274 = vmatpush1.msra.mxu0 0.0
  %1275 = vmatprep.subr.mxu0 0.0
  %1276 = vmatpush1.msra.mxu0 0.0
  %1277 = vmatprep.subr.mxu0 0.0
  %1278 = vmatpush1.msra.mxu0 0.0
  %1279 = vmatprep.subr.mxu0 0.0
  %1280 = vmatpush1.msra.mxu0 0.0
  %1281 = vmatprep.subr.mxu0 0.0
  %1282 = vmatpush1.msra.mxu0 0.0
  %1283 = vmatprep.subr.mxu0 0.0
  %1284 = vmatpush1.msra.mxu0 0.0
  %1285 = vmatprep.subr.mxu0 0.0
  %1286 = vmatpush1.msra.mxu0 0.0
  %1287 = vmatprep.subr.mxu0 0.0
  %1288 = vmatpush1.msra.mxu0 0.0
  %1289 = vmatprep.subr.mxu0 0.0
  %1290 = vmatpush1.msra.mxu0 0.0
  %1291 = vmatprep.subr.mxu0 0.0
  %1292 = vmatpush1.msra.mxu0 0.0
  %1293 = vmatprep.subr.mxu0 0.0
  %1294 = vmatpush1.msra.mxu0 0.0
  %1295 = vmatprep.subr.mxu0 0.0
  %1296 = vmatpush1.msra.mxu0 0.0
  %1297 = vmatprep.subr.mxu0 0.0
  %1298 = vmatpush1.msra.mxu0 0.0
  %1299 = vmatprep.mubr.f32.mxu0 0.0
  %1300 = vmatmul.mubr.f32.gmra.mrb[0].mxu0 %v1233
  %v1301 = vpop.f32.mrb[0].mxu0
  %v1302 = vadd.f32 0.0, %v1301
  %v1303 = vpop.f32.mrb[0].mxu0
  %1304 = vdwg.mxu0
  %v1305 = vadd.f32 %v1232, %v1302
  %v1306 = vxor.u32 %v1305, 2147483648
  %v1307 = vmul.f32 %v1306, 1.442695
  %v1308 = vpow.pop %v1307
  %v1309 = vadd.f32 %v1308, 1.0
  %v1310 = vrcp.pop %v1309
  %v1311 = vmul.f32 1.0, %v1310
  %v1312 = vtanh.pop %v1305
  %v1313 = vmul.f32 %v1311, %v1118
  %1315 = vrot.lane.b32.xlu0 %v1312, 64
  %v1316 = vpop.permute.xlu0 %1315
  %v1318 = vmul.f32 %v1311, %v1316
  %1320 = vrot.lane.b32.xlu0 %v1318, 32
  %v1321 = vpop.permute.xlu0 %1320
  %v1323 = vadd.f32 %v1313, %v1321
  %v1324 = vtanh.pop %v1323
  %1326 = vrot.lane.b32.xlu0 %v1324, 64
  %v1327 = vpop.permute.xlu0 %1326
  %v1329 = vmul.f32 %v1311, %v1327
  %1331 = vrot.lane.b32.xlu0 %v1329, 32
  %v1332 = vpop.permute.xlu0 %1331
  %1335 = vrot.lane.b32.xlu0 %v1230, 64
  %v1336 = vpop.permute.xlu0 %1335
  %v1338 = vsel %vm203, %v1332, %v1336
  %v1340 = vsel %vm313, %v1338, 0
  %1342 = vmatprep.subr.mxu0 0.0
  %1343 = vmatpush1.msra.mxu0 %v193
  %1344 = vmatprep.subr.mxu0 0.0
  %1345 = vmatpush1.msra.mxu0 %v194
  %1346 = vmatprep.subr.mxu0 0.0
  %1347 = vmatpush1.msra.mxu0 %v195
  %1348 = vmatprep.subr.mxu0 0.0
  %1349 = vmatpush1.msra.mxu0 %v196
  %1350 = vmatprep.subr.mxu0 0.0
  %1351 = vmatpush1.msra.mxu0 %v197
  %1352 = vmatprep.subr.mxu0 0.0
  %1353 = vmatpush1.msra.mxu0 %v198
  %1354 = vmatprep.subr.mxu0 0.0
  %1355 = vmatpush1.msra.mxu0 %v199
  %1356 = vmatprep.subr.mxu0 0.0
  %1357 = vmatpush1.msra.mxu0 %v200
  %1358 = vmatprep.subr.mxu0 0.0
  %1359 = vmatpush1.msra.mxu0 0.0
  %1360 = vmatprep.subr.mxu0 0.0
  %1361 = vmatpush1.msra.mxu0 0.0
  %1362 = vmatprep.subr.mxu0 0.0
  %1363 = vmatpush1.msra.mxu0 0.0
  %1364 = vmatprep.subr.mxu0 0.0
  %1365 = vmatpush1.msra.mxu0 0.0
  %1366 = vmatprep.subr.mxu0 0.0
  %1367 = vmatpush1.msra.mxu0 0.0
  %1368 = vmatprep.subr.mxu0 0.0
  %1369 = vmatpush1.msra.mxu0 0.0
  %1370 = vmatprep.subr.mxu0 0.0
  %1371 = vmatpush1.msra.mxu0 0.0
  %1372 = vmatprep.subr.mxu0 0.0
  %1373 = vmatpush1.msra.mxu0 0.0
  %1374 = vmatprep.subr.mxu0 0.0
  %1375 = vmatpush1.msra.mxu0 0.0
  %1376 = vmatprep.subr.mxu0 0.0
  %1377 = vmatpush1.msra.mxu0 0.0
  %1378 = vmatprep.subr.mxu0 0.0
  %1379 = vmatpush1.msra.mxu0 0.0
  %1380 = vmatprep.subr.mxu0 0.0
  %1381 = vmatpush1.msra.mxu0 0.0
  %1382 = vmatprep.subr.mxu0 0.0
  %1383 = vmatpush1.msra.mxu0 0.0
  %1384 = vmatprep.subr.mxu0 0.0
  %1385 = vmatpush1.msra.mxu0 0.0
  %1386 = vmatprep.subr.mxu0 0.0
  %1387 = vmatpush1.msra.mxu0 0.0
  %1388 = vmatprep.subr.mxu0 0.0
  %1389 = vmatpush1.msra.mxu0 0.0
  %1390 = vmatprep.subr.mxu0 0.0
  %1391 = vmatpush1.msra.mxu0 0.0
  %1392 = vmatprep.subr.mxu0 0.0
  %1393 = vmatpush1.msra.mxu0 0.0
  %1394 = vmatprep.subr.mxu0 0.0
  %1395 = vmatpush1.msra.mxu0 0.0
  %1396 = vmatprep.subr.mxu0 0.0
  %1397 = vmatpush1.msra.mxu0 0.0
  %1398 = vmatprep.subr.mxu0 0.0
  %1399 = vmatpush1.msra.mxu0 0.0
  %1400 = vmatprep.subr.mxu0 0.0
  %1401 = vmatpush1.msra.mxu0 0.0
  %1402 = vmatprep.subr.mxu0 0.0
  %1403 = vmatpush1.msra.mxu0 0.0
  %1404 = vmatprep.subr.mxu0 0.0
  %1405 = vmatpush1.msra.mxu0 0.0
  %1406 = vmatprep.mubr.f32.mxu0 0.0
  %1407 = vmatmul.mubr.f32.gmra.mrb[0].mxu0 %v1340
  %v1408 = vpop.f32.mrb[0].mxu0
  %v1409 = vadd.f32 %v311, %v1408
  %v1410 = vpop.f32.mrb[0].mxu0
  %1411 = vdwg.mxu0
  %v1412 = vxor.u32 %v1409, 2147483648
  %v1413 = vmul.f32 %v1412, 1.442695
  %v1414 = vpow.pop %v1413
  %v1415 = vadd.f32 %v1414, 1.0
  %v1416 = vrcp.pop %v1415
  %v1417 = vmul.f32 1.0, %v1416
  %v1418 = vtanh.pop %v1409
  %v1419 = vmul.f32 %v1417, %v1224
  %1421 = vrot.lane.b32.xlu0 %v1418, 64
  %v1422 = vpop.permute.xlu0 %1421
  %v1424 = vmul.f32 %v1417, %v1422
  %1426 = vrot.lane.b32.xlu0 %v1424, 32
  %v1427 = vpop.permute.xlu0 %1426
  %v1429 = vadd.f32 %v1419, %v1427
  %v1430 = vtanh.pop %v1429
  %1432 = vrot.lane.b32.xlu0 %v1430, 64
  %v1433 = vpop.permute.xlu0 %1432
  %v1435 = vmul.f32 %v1417, %v1433
  %s1436 = scalar_lea.vmem [#allocation2], 48
  %v1437 = vld [vmem:[%s1436] sm:$0xff]
  %v1438 = vsel %vm203, %v1332, 0
  %1440 = vmatprep.subr.mxu0 0.0
  %1441 = vmatpush1.msra.mxu0 %v189
  %1442 = vmatprep.subr.mxu0 0.0
  %1443 = vmatpush1.msra.mxu0 %v190
  %1444 = vmatprep.subr.mxu0 0.0
  %1445 = vmatpush1.msra.mxu0 %v191
  %1446 = vmatprep.subr.mxu0 0.0
  %1447 = vmatpush1.msra.mxu0 %v192
  %1448 = vmatprep.subr.mxu0 0.0
  %1449 = vmatpush1.msra.mxu0 0.0
  %1450 = vmatprep.subr.mxu0 0.0
  %1451 = vmatpush1.msra.mxu0 0.0
  %1452 = vmatprep.subr.mxu0 0.0
  %1453 = vmatpush1.msra.mxu0 0.0
  %1454 = vmatprep.subr.mxu0 0.0
  %1455 = vmatpush1.msra.mxu0 0.0
  %1456 = vmatprep.subr.mxu0 0.0
  %1457 = vmatpush1.msra.mxu0 0.0
  %1458 = vmatprep.subr.mxu0 0.0
  %1459 = vmatpush1.msra.mxu0 0.0
  %1460 = vmatprep.subr.mxu0 0.0
  %1461 = vmatpush1.msra.mxu0 0.0
  %1462 = vmatprep.subr.mxu0 0.0
  %1463 = vmatpush1.msra.mxu0 0.0
  %1464 = vmatprep.subr.mxu0 0.0
  %1465 = vmatpush1.msra.mxu0 0.0
  %1466 = vmatprep.subr.mxu0 0.0
  %1467 = vmatpush1.msra.mxu0 0.0
  %1468 = vmatprep.subr.mxu0 0.0
  %1469 = vmatpush1.msra.mxu0 0.0
  %1470 = vmatprep.subr.mxu0 0.0
  %1471 = vmatpush1.msra.mxu0 0.0
  %1472 = vmatprep.subr.mxu0 0.0
  %1473 = vmatpush1.msra.mxu0 0.0
  %1474 = vmatprep.subr.mxu0 0.0
  %1475 = vmatpush1.msra.mxu0 0.0
  %1476 = vmatprep.subr.mxu0 0.0
  %1477 = vmatpush1.msra.mxu0 0.0
  %1478 = vmatprep.subr.mxu0 0.0
  %1479 = vmatpush1.msra.mxu0 0.0
  %1480 = vmatprep.subr.mxu0 0.0
  %1481 = vmatpush1.msra.mxu0 0.0
  %1482 = vmatprep.subr.mxu0 0.0
  %1483 = vmatpush1.msra.mxu0 0.0
  %1484 = vmatprep.subr.mxu0 0.0
  %1485 = vmatpush1.msra.mxu0 0.0
  %1486 = vmatprep.subr.mxu0 0.0
  %1487 = vmatpush1.msra.mxu0 0.0
  %1488 = vmatprep.subr.mxu0 0.0
  %1489 = vmatpush1.msra.mxu0 0.0
  %1490 = vmatprep.subr.mxu0 0.0
  %1491 = vmatpush1.msra.mxu0 0.0
  %1492 = vmatprep.subr.mxu0 0.0
  %1493 = vmatpush1.msra.mxu0 0.0
  %1494 = vmatprep.subr.mxu0 0.0
  %1495 = vmatpush1.msra.mxu0 0.0
  %1496 = vmatprep.subr.mxu0 0.0
  %1497 = vmatpush1.msra.mxu0 0.0
  %1498 = vmatprep.subr.mxu0 0.0
  %1499 = vmatpush1.msra.mxu0 0.0
  %1500 = vmatprep.subr.mxu0 0.0
  %1501 = vmatpush1.msra.mxu0 0.0
  %1502 = vmatprep.subr.mxu0 0.0
  %1503 = vmatpush1.msra.mxu0 0.0
  %1504 = vmatprep.mubr.f32.mxu0 0.0
  %1505 = vmatmul.mubr.f32.gmra.mrb[0].mxu0 %v1438
  %v1506 = vpop.f32.mrb[0].mxu0
  %v1507 = vadd.f32 0.0, %v1506
  %v1508 = vpop.f32.mrb[0].mxu0
  %1509 = vdwg.mxu0
  %v1510 = vadd.f32 %v1437, %v1507
  %v1511 = vxor.u32 %v1510, 2147483648
  %v1512 = vmul.f32 %v1511, 1.442695
  %v1513 = vpow.pop %v1512
  %v1514 = vadd.f32 %v1513, 1.0
  %v1515 = vrcp.pop %v1514
  %v1516 = vmul.f32 1.0, %v1515
  %v1517 = vtanh.pop %v1510
  %v1518 = vmul.f32 %v1516, %v1323
  %1520 = vrot.lane.b32.xlu0 %v1517, 64
  %v1521 = vpop.permute.xlu0 %1520
  %v1523 = vmul.f32 %v1516, %v1521
  %1525 = vrot.lane.b32.xlu0 %v1523, 32
  %v1526 = vpop.permute.xlu0 %1525
  %v1528 = vadd.f32 %v1518, %v1526
  %v1529 = vtanh.pop %v1528
  %1531 = vrot.lane.b32.xlu0 %v1529, 64
  %v1532 = vpop.permute.xlu0 %1531
  %v1534 = vmul.f32 %v1516, %v1532
  %1536 = vrot.lane.b32.xlu0 %v1534, 32
  %v1537 = vpop.permute.xlu0 %1536
  %1540 = vrot.lane.b32.xlu0 %v1435, 64
  %v1541 = vpop.permute.xlu0 %1540
  %v1543 = vsel %vm203, %v1537, %v1541
  %v1545 = vsel %vm313, %v1543, 0
  %1547 = vmatprep.subr.mxu0 0.0
  %1548 = vmatpush1.msra.mxu0 %v193
  %1549 = vmatprep.subr.mxu0 0.0
  %1550 = vmatpush1.msra.mxu0 %v194
  %1551 = vmatprep.subr.mxu0 0.0
  %1552 = vmatpush1.msra.mxu0 %v195
  %1553 = vmatprep.subr.mxu0 0.0
  %1554 = vmatpush1.msra.mxu0 %v196
  %1555 = vmatprep.subr.mxu0 0.0
  %1556 = vmatpush1.msra.mxu0 %v197
  %1557 = vmatprep.subr.mxu0 0.0
  %1558 = vmatpush1.msra.mxu0 %v198
  %1559 = vmatprep.subr.mxu0 0.0
  %1560 = vmatpush1.msra.mxu0 %v199
  %1561 = vmatprep.subr.mxu0 0.0
  %1562 = vmatpush1.msra.mxu0 %v200
  %1563 = vmatprep.subr.mxu0 0.0
  %1564 = vmatpush1.msra.mxu0 0.0
  %1565 = vmatprep.subr.mxu0 0.0
  %1566 = vmatpush1.msra.mxu0 0.0
  %1567 = vmatprep.subr.mxu0 0.0
  %1568 = vmatpush1.msra.mxu0 0.0
  %1569 = vmatprep.subr.mxu0 0.0
  %1570 = vmatpush1.msra.mxu0 0.0
  %1571 = vmatprep.subr.mxu0 0.0
  %1572 = vmatpush1.msra.mxu0 0.0
  %1573 = vmatprep.subr.mxu0 0.0
  %1574 = vmatpush1.msra.mxu0 0.0
  %1575 = vmatprep.subr.mxu0 0.0
  %1576 = vmatpush1.msra.mxu0 0.0
  %1577 = vmatprep.subr.mxu0 0.0
  %1578 = vmatpush1.msra.mxu0 0.0
  %1579 = vmatprep.subr.mxu0 0.0
  %1580 = vmatpush1.msra.mxu0 0.0
  %1581 = vmatprep.subr.mxu0 0.0
  %1582 = vmatpush1.msra.mxu0 0.0
  %1583 = vmatprep.subr.mxu0 0.0
  %1584 = vmatpush1.msra.mxu0 0.0
  %1585 = vmatprep.subr.mxu0 0.0
  %1586 = vmatpush1.msra.mxu0 0.0
  %1587 = vmatprep.subr.mxu0 0.0
  %1588 = vmatpush1.msra.mxu0 0.0
  %1589 = vmatprep.subr.mxu0 0.0
  %1590 = vmatpush1.msra.mxu0 0.0
  %1591 = vmatprep.subr.mxu0 0.0
  %1592 = vmatpush1.msra.mxu0 0.0
  %1593 = vmatprep.subr.mxu0 0.0
  %1594 = vmatpush1.msra.mxu0 0.0
  %1595 = vmatprep.subr.mxu0 0.0
  %1596 = vmatpush1.msra.mxu0 0.0
  %1597 = vmatprep.subr.mxu0 0.0
  %1598 = vmatpush1.msra.mxu0 0.0
  %1599 = vmatprep.subr.mxu0 0.0
  %1600 = vmatpush1.msra.mxu0 0.0
  %1601 = vmatprep.subr.mxu0 0.0
  %1602 = vmatpush1.msra.mxu0 0.0
  %1603 = vmatprep.subr.mxu0 0.0
  %1604 = vmatpush1.msra.mxu0 0.0
  %1605 = vmatprep.subr.mxu0 0.0
  %1606 = vmatpush1.msra.mxu0 0.0
  %1607 = vmatprep.subr.mxu0 0.0
  %1608 = vmatpush1.msra.mxu0 0.0
  %1609 = vmatprep.subr.mxu0 0.0
  %1610 = vmatpush1.msra.mxu0 0.0
  %1611 = vmatprep.mubr.f32.mxu0 0.0
  %1612 = vmatmul.mubr.f32.gmra.mrb[0].mxu0 %v1545
  %v1613 = vpop.f32.mrb[0].mxu0
  %v1614 = vadd.f32 %v311, %v1613
  %v1615 = vpop.f32.mrb[0].mxu0
  %1616 = vdwg.mxu0
  %v1617 = vxor.u32 %v1614, 2147483648
  %v1618 = vmul.f32 %v1617, 1.442695
  %v1619 = vpow.pop %v1618
  %v1620 = vadd.f32 %v1619, 1.0
  %v1621 = vrcp.pop %v1620
  %v1622 = vmul.f32 1.0, %v1621
  %v1623 = vtanh.pop %v1614
  %v1624 = vmul.f32 %v1622, %v1429
  %1626 = vrot.lane.b32.xlu0 %v1623, 64
  %v1627 = vpop.permute.xlu0 %1626
  %v1629 = vmul.f32 %v1622, %v1627
  %1631 = vrot.lane.b32.xlu0 %v1629, 32
  %v1632 = vpop.permute.xlu0 %1631
  %v1634 = vadd.f32 %v1624, %v1632
  %v1635 = vtanh.pop %v1634
  %1637 = vrot.lane.b32.xlu0 %v1635, 64
  %v1638 = vpop.permute.xlu0 %1637
  %v1640 = vmul.f32 %v1622, %v1638
  %s1641 = scalar_lea.vmem [#allocation2], 56
  %v1642 = vld [vmem:[%s1641] sm:$0xff]
  %v1643 = vsel %vm203, %v1537, 0
  %1645 = vmatprep.subr.mxu0 0.0
  %1646 = vmatpush1.msra.mxu0 %v189
  %1647 = vmatprep.subr.mxu0 0.0
  %1648 = vmatpush1.msra.mxu0 %v190
  %1649 = vmatprep.subr.mxu0 0.0
  %1650 = vmatpush1.msra.mxu0 %v191
  %1651 = vmatprep.subr.mxu0 0.0
  %1652 = vmatpush1.msra.mxu0 %v192
  %1653 = vmatprep.subr.mxu0 0.0
  %1654 = vmatpush1.msra.mxu0 0.0
  %1655 = vmatprep.subr.mxu0 0.0
  %1656 = vmatpush1.msra.mxu0 0.0
  %1657 = vmatprep.subr.mxu0 0.0
  %1658 = vmatpush1.msra.mxu0 0.0
  %1659 = vmatprep.subr.mxu0 0.0
  %1660 = vmatpush1.msra.mxu0 0.0
  %1661 = vmatprep.subr.mxu0 0.0
  %1662 = vmatpush1.msra.mxu0 0.0
  %1663 = vmatprep.subr.mxu0 0.0
  %1664 = vmatpush1.msra.mxu0 0.0
  %1665 = vmatprep.subr.mxu0 0.0
  %1666 = vmatpush1.msra.mxu0 0.0
  %1667 = vmatprep.subr.mxu0 0.0
  %1668 = vmatpush1.msra.mxu0 0.0
  %1669 = vmatprep.subr.mxu0 0.0
  %1670 = vmatpush1.msra.mxu0 0.0
  %1671 = vmatprep.subr.mxu0 0.0
  %1672 = vmatpush1.msra.mxu0 0.0
  %1673 = vmatprep.subr.mxu0 0.0
  %1674 = vmatpush1.msra.mxu0 0.0
  %1675 = vmatprep.subr.mxu0 0.0
  %1676 = vmatpush1.msra.mxu0 0.0
  %1677 = vmatprep.subr.mxu0 0.0
  %1678 = vmatpush1.msra.mxu0 0.0
  %1679 = vmatprep.subr.mxu0 0.0
  %1680 = vmatpush1.msra.mxu0 0.0
  %1681 = vmatprep.subr.mxu0 0.0
  %1682 = vmatpush1.msra.mxu0 0.0
  %1683 = vmatprep.subr.mxu0 0.0
  %1684 = vmatpush1.msra.mxu0 0.0
  %1685 = vmatprep.subr.mxu0 0.0
  %1686 = vmatpush1.msra.mxu0 0.0
  %1687 = vmatprep.subr.mxu0 0.0
  %1688 = vmatpush1.msra.mxu0 0.0
  %1689 = vmatprep.subr.mxu0 0.0
  %1690 = vmatpush1.msra.mxu0 0.0
  %1691 = vmatprep.subr.mxu0 0.0
  %1692 = vmatpush1.msra.mxu0 0.0
  %1693 = vmatprep.subr.mxu0 0.0
  %1694 = vmatpush1.msra.mxu0 0.0
  %1695 = vmatprep.subr.mxu0 0.0
  %1696 = vmatpush1.msra.mxu0 0.0
  %1697 = vmatprep.subr.mxu0 0.0
  %1698 = vmatpush1.msra.mxu0 0.0
  %1699 = vmatprep.subr.mxu0 0.0
  %1700 = vmatpush1.msra.mxu0 0.0
  %1701 = vmatprep.subr.mxu0 0.0
  %1702 = vmatpush1.msra.mxu0 0.0
  %1703 = vmatprep.subr.mxu0 0.0
  %1704 = vmatpush1.msra.mxu0 0.0
  %1705 = vmatprep.subr.mxu0 0.0
  %1706 = vmatpush1.msra.mxu0 0.0
  %1707 = vmatprep.subr.mxu0 0.0
  %1708 = vmatpush1.msra.mxu0 0.0
  %1709 = vmatprep.mubr.f32.mxu0 0.0
  %1710 = vmatmul.mubr.f32.gmra.mrb[0].mxu0 %v1643
  %v1711 = vpop.f32.mrb[0].mxu0
  %v1712 = vadd.f32 0.0, %v1711
  %v1713 = vpop.f32.mrb[0].mxu0
  %1714 = vdwg.mxu0
  %v1715 = vadd.f32 %v1642, %v1712
  %v1716 = vxor.u32 %v1715, 2147483648
  %v1717 = vmul.f32 %v1716, 1.442695
  %v1718 = vpow.pop %v1717
  %v1719 = vadd.f32 %v1718, 1.0
  %v1720 = vrcp.pop %v1719
  %v1721 = vmul.f32 1.0, %v1720
  %v1722 = vtanh.pop %v1715
  %v1723 = vmul.f32 %v1721, %v1528
  %1725 = vrot.lane.b32.xlu0 %v1722, 64
  %v1726 = vpop.permute.xlu0 %1725
  %v1728 = vmul.f32 %v1721, %v1726
  %1730 = vrot.lane.b32.xlu0 %v1728, 32
  %v1731 = vpop.permute.xlu0 %1730
  %v1733 = vadd.f32 %v1723, %v1731
  %v1734 = vtanh.pop %v1733
  %1736 = vrot.lane.b32.xlu0 %v1734, 64
  %v1737 = vpop.permute.xlu0 %1736
  %v1739 = vmul.f32 %v1721, %v1737
  %1741 = vrot.lane.b32.xlu0 %v1739, 32
  %v1742 = vpop.permute.xlu0 %1741
  %1745 = vrot.lane.b32.xlu0 %v1640, 64
  %v1746 = vpop.permute.xlu0 %1745
  %v1748 = vsel %vm203, %v1742, %v1746
  %v1750 = vsel %vm313, %v1748, 0
  %1752 = vmatprep.subr.mxu0 0.0
  %1753 = vmatpush1.msra.mxu0 %v193
  %1754 = vmatprep.subr.mxu0 0.0
  %1755 = vmatpush1.msra.mxu0 %v194
  %1756 = vmatprep.subr.mxu0 0.0
  %1757 = vmatpush1.msra.mxu0 %v195
  %1758 = vmatprep.subr.mxu0 0.0
  %1759 = vmatpush1.msra.mxu0 %v196
  %1760 = vmatprep.subr.mxu0 0.0
  %1761 = vmatpush1.msra.mxu0 %v197
  %1762 = vmatprep.subr.mxu0 0.0
  %1763 = vmatpush1.msra.mxu0 %v198
  %1764 = vmatprep.subr.mxu0 0.0
  %1765 = vmatpush1.msra.mxu0 %v199
  %1766 = vmatprep.subr.mxu0 0.0
  %1767 = vmatpush1.msra.mxu0 %v200
  %1768 = vmatprep.subr.mxu0 0.0
  %1769 = vmatpush1.msra.mxu0 0.0
  %1770 = vmatprep.subr.mxu0 0.0
  %1771 = vmatpush1.msra.mxu0 0.0
  %1772 = vmatprep.subr.mxu0 0.0
  %1773 = vmatpush1.msra.mxu0 0.0
  %1774 = vmatprep.subr.mxu0 0.0
  %1775 = vmatpush1.msra.mxu0 0.0
  %1776 = vmatprep.subr.mxu0 0.0
  %1777 = vmatpush1.msra.mxu0 0.0
  %1778 = vmatprep.subr.mxu0 0.0
  %1779 = vmatpush1.msra.mxu0 0.0
  %1780 = vmatprep.subr.mxu0 0.0
  %1781 = vmatpush1.msra.mxu0 0.0
  %1782 = vmatprep.subr.mxu0 0.0
  %1783 = vmatpush1.msra.mxu0 0.0
  %1784 = vmatprep.subr.mxu0 0.0
  %1785 = vmatpush1.msra.mxu0 0.0
  %1786 = vmatprep.subr.mxu0 0.0
  %1787 = vmatpush1.msra.mxu0 0.0
  %1788 = vmatprep.subr.mxu0 0.0
  %1789 = vmatpush1.msra.mxu0 0.0
  %1790 = vmatprep.subr.mxu0 0.0
  %1791 = vmatpush1.msra.mxu0 0.0
  %1792 = vmatprep.subr.mxu0 0.0
  %1793 = vmatpush1.msra.mxu0 0.0
  %1794 = vmatprep.subr.mxu0 0.0
  %1795 = vmatpush1.msra.mxu0 0.0
  %1796 = vmatprep.subr.mxu0 0.0
  %1797 = vmatpush1.msra.mxu0 0.0
  %1798 = vmatprep.subr.mxu0 0.0
  %1799 = vmatpush1.msra.mxu0 0.0
  %1800 = vmatprep.subr.mxu0 0.0
  %1801 = vmatpush1.msra.mxu0 0.0
  %1802 = vmatprep.subr.mxu0 0.0
  %1803 = vmatpush1.msra.mxu0 0.0
  %1804 = vmatprep.subr.mxu0 0.0
  %1805 = vmatpush1.msra.mxu0 0.0
  %1806 = vmatprep.subr.mxu0 0.0
  %1807 = vmatpush1.msra.mxu0 0.0
  %1808 = vmatprep.subr.mxu0 0.0
  %1809 = vmatpush1.msra.mxu0 0.0
  %1810 = vmatprep.subr.mxu0 0.0
  %1811 = vmatpush1.msra.mxu0 0.0
  %1812 = vmatprep.subr.mxu0 0.0
  %1813 = vmatpush1.msra.mxu0 0.0
  %1814 = vmatprep.subr.mxu0 0.0
  %1815 = vmatpush1.msra.mxu0 0.0
  %1816 = vmatprep.mubr.f32.mxu0 0.0
  %1817 = vmatmul.mubr.f32.gmra.mrb[0].mxu0 %v1750
  %v1818 = vpop.f32.mrb[0].mxu0
  %v1819 = vadd.f32 %v311, %v1818
  %v1820 = vpop.f32.mrb[0].mxu0
  %1821 = vdwg.mxu0
  %v1822 = vxor.u32 %v1819, 2147483648
  %v1823 = vmul.f32 %v1822, 1.442695
  %v1824 = vpow.pop %v1823
  %v1825 = vadd.f32 %v1824, 1.0
  %v1826 = vrcp.pop %v1825
  %v1827 = vmul.f32 1.0, %v1826
  %v1828 = vtanh.pop %v1819
  %v1829 = vmul.f32 %v1827, %v1634
  %1831 = vrot.lane.b32.xlu0 %v1828, 64
  %v1832 = vpop.permute.xlu0 %1831
  %v1834 = vmul.f32 %v1827, %v1832
  %1836 = vrot.lane.b32.xlu0 %v1834, 32
  %v1837 = vpop.permute.xlu0 %1836
  %v1839 = vadd.f32 %v1829, %v1837
  %v1840 = vtanh.pop %v1839
  %1842 = vrot.lane.b32.xlu0 %v1840, 64
  %v1843 = vpop.permute.xlu0 %1842
  %v1845 = vmul.f32 %v1827, %v1843
  %v1846 = vld [vmem:[%s6] sm:$0xff]
  %v1847 = vld [vmem:[%s6 + $0x8] sm:$0xff]
  %v1848 = vld [vmem:[%s6 + $0x10] sm:$0xff]
  %v1849 = vld [vmem:[%s6 + $0x18] sm:$0xff]
  %v1850 = vld [vmem:[#allocation3] sm:$0x1]
  %v1852 = vlaneseq
  %v1853 = vshrl.u32 %v1852, 7
  %v1854 = vsub.s32 0, %v1853
  %v1855 = vrot.slane %v1850, %v1854
  %1858 = vrot.lane.b32.xlu0 %v1845, 32
  %v1859 = vpop.permute.xlu0 %1858
  %v1860 = vsel %vm203, %v1859, 0
  %1862 = vmatprep.subr.mxu0 0.0
  %1863 = vmatpush1.msra.mxu0 %v1846
  %1864 = vmatprep.subr.mxu0 0.0
  %1865 = vmatpush1.msra.mxu0 %v1847
  %1866 = vmatprep.subr.mxu0 0.0
  %1867 = vmatpush1.msra.mxu0 %v1848
  %1868 = vmatprep.subr.mxu0 0.0
  %1869 = vmatpush1.msra.mxu0 %v1849
  %1870 = vmatprep.subr.mxu0 0.0
  %1871 = vmatpush1.msra.mxu0 0.0
  %1872 = vmatprep.subr.mxu0 0.0
  %1873 = vmatpush1.msra.mxu0 0.0
  %1874 = vmatprep.subr.mxu0 0.0
  %1875 = vmatpush1.msra.mxu0 0.0
  %1876 = vmatprep.subr.mxu0 0.0
  %1877 = vmatpush1.msra.mxu0 0.0
  %1878 = vmatprep.subr.mxu0 0.0
  %1879 = vmatpush1.msra.mxu0 0.0
  %1880 = vmatprep.subr.mxu0 0.0
  %1881 = vmatpush1.msra.mxu0 0.0
  %1882 = vmatprep.subr.mxu0 0.0
  %1883 = vmatpush1.msra.mxu0 0.0
  %1884 = vmatprep.subr.mxu0 0.0
  %1885 = vmatpush1.msra.mxu0 0.0
  %1886 = vmatprep.subr.mxu0 0.0
  %1887 = vmatpush1.msra.mxu0 0.0
  %1888 = vmatprep.subr.mxu0 0.0
  %1889 = vmatpush1.msra.mxu0 0.0
  %1890 = vmatprep.subr.mxu0 0.0
  %1891 = vmatpush1.msra.mxu0 0.0
  %1892 = vmatprep.subr.mxu0 0.0
  %1893 = vmatpush1.msra.mxu0 0.0
  %1894 = vmatprep.subr.mxu0 0.0
  %1895 = vmatpush1.msra.mxu0 0.0
  %1896 = vmatprep.subr.mxu0 0.0
  %1897 = vmatpush1.msra.mxu0 0.0
  %1898 = vmatprep.subr.mxu0 0.0
  %1899 = vmatpush1.msra.mxu0 0.0
  %1900 = vmatprep.subr.mxu0 0.0
  %1901 = vmatpush1.msra.mxu0 0.0
  %1902 = vmatprep.subr.mxu0 0.0
  %1903 = vmatpush1.msra.mxu0 0.0
  %1904 = vmatprep.subr.mxu0 0.0
  %1905 = vmatpush1.msra.mxu0 0.0
  %1906 = vmatprep.subr.mxu0 0.0
  %1907 = vmatpush1.msra.mxu0 0.0
  %1908 = vmatprep.subr.mxu0 0.0
  %1909 = vmatpush1.msra.mxu0 0.0
  %1910 = vmatprep.subr.mxu0 0.0
  %1911 = vmatpush1.msra.mxu0 0.0
  %1912 = vmatprep.subr.mxu0 0.0
  %1913 = vmatpush1.msra.mxu0 0.0
  %1914 = vmatprep.subr.mxu0 0.0
  %1915 = vmatpush1.msra.mxu0 0.0
  %1916 = vmatprep.subr.mxu0 0.0
  %1917 = vmatpush1.msra.mxu0 0.0
  %1918 = vmatprep.subr.mxu0 0.0
  %1919 = vmatpush1.msra.mxu0 0.0
  %1920 = vmatprep.subr.mxu0 0.0
  %1921 = vmatpush1.msra.mxu0 0.0
  %1922 = vmatprep.subr.mxu0 0.0
  %1923 = vmatpush1.msra.mxu0 0.0
  %1924 = vmatprep.subr.mxu0 0.0
  %1925 = vmatpush1.msra.mxu0 0.0
  %1926 = vmatprep.mubr.f32.mxu0 0.0
  %1927 = vmatmul.mubr.f32.gmra.mrb[0].mxu0 %v1860
  %v1928 = vpop.f32.mrb[0].mxu0
  %v1929 = vadd.f32 %v1855, %v1928
  %v1930 = vpop.f32.mrb[0].mxu0
  %1931 = vdwg.mxu0
  %vm1932 = vcmask 7168
  %1933 = vst.msk [vmem:[%s8] sm:$0xff] %vm1932, %v1929
  // Predicated region
  $region34: #{lstm_model_forward.1} parent=0 // pred_check
    _
  $region35: #{lstm_model_forward.1} parent=0 // pred_check_branch
    %1935 = sbr.rel (0) target = $region37
  $region36: #{lstm_model_forward.1} parent=0 // pred_region
    _
  $region37: #{lstm_model_forward.1} parent=0 // pred_fallthru
    _
  // Predicated region
  $region38: #{lstm_model_forward.1} parent=0 // pred_check
    _
  $region39: #{lstm_model_forward.1} parent=0 // pred_check_branch
    %1937 = sbr.rel (0) target = $region41
  $region40: #{lstm_model_forward.1} parent=0 // pred_region
    _
  $region41: #{lstm_model_forward.1} parent=0 // pred_fallthru
    _

</llo_original>
